<compile_context>
chip_gen: v5e
topology: v5e:2x2
jax: 0.10.0
libtpu: 0.0.40
codegen_flags: <defaults>
</compile_context>

<pallas_src>
import jax
import jax.numpy as jnp
from jax import lax
from jax.experimental import pallas as pl
from jax.experimental.pallas import tpu as pltpu

LEAKY = 0.2
BN_EPS = 1e-5


def _leaky_relu(x):
    return jnp.where(x > 0, x, LEAKY * x)


def _round_up(x, m):
    return ((x + m - 1) // m) * m


def _make_kernel(*, B, tile_b, num_tiles, resident, needs_mask):
    inv_b = 1.0 / B

    def kernel(x_ref, w1_ref, b1_ref, w2_ref, b2_ref, gamma_ref, beta_ref,
               w3_ref, b3_ref, out_ref, *scratch):
        if resident:
            h2_scr, sum_scr, ssq_scr, scale_scr, shift_scr = scratch
        else:
            sum_scr, ssq_scr, scale_scr, shift_scr = scratch

        phase = pl.program_id(0)
        i = pl.program_id(1)
        off = pl.multiple_of(i * tile_b, tile_b)

        def compute_h2():
            xb = x_ref[...].astype(jnp.bfloat16)          # cast per tile (VPU)
            h1 = jnp.dot(xb, w1_ref[...], preferred_element_type=jnp.float32)
            h1 = _leaky_relu(h1 + b1_ref[...])            # (tile_b, 256) f32
            return jnp.dot(h1.astype(jnp.bfloat16), w2_ref[...],
                           preferred_element_type=jnp.float32) + b2_ref[...]

        # ---------------- phase 0: h2 tiles + global batch statistics ----------
        @pl.when(phase == 0)
        def _stats():
            @pl.when(i == 0)
            def _():
                sum_scr[...] = jnp.zeros_like(sum_scr)
                ssq_scr[...] = jnp.zeros_like(ssq_scr)

            h2 = compute_h2()                             # (tile_b, 128) f32
            if resident:
                h2_scr[pl.ds(off, tile_b), :] = h2        # keep resident in VMEM

            def accumulate(vals):
                sum_scr[...] += jnp.sum(vals, axis=0, keepdims=True)
                ssq_scr[...] += jnp.sum(vals * vals, axis=0, keepdims=True)

            if needs_mask:
                # Only the last tile has padded rows; mask it there only.
                @pl.when(i == num_tiles - 1)
                def _():
                    row = off + lax.broadcasted_iota(jnp.int32, (tile_b, 1), 0)
                    accumulate(jnp.where(row < B, h2, 0.0))

                @pl.when(i != num_tiles - 1)
                def _():
                    accumulate(h2)
            else:
                accumulate(h2)

        # ---------------- phase 1: fold BN + LeakyReLU + head + sigmoid --------
        @pl.when(phase == 1)
        def _head():
            @pl.when(i == 0)
            def _():
                mean = sum_scr[...] * inv_b
                var = jnp.maximum(ssq_scr[...] * inv_b - mean * mean, 0.0)
                scale = gamma_ref[...] * lax.rsqrt(var + BN_EPS)
                scale_scr[...] = scale
                shift_scr[...] = beta_ref[...] - mean * scale

            if resident:
                h2 = h2_scr[pl.ds(off, tile_b), :]
            else:
                h2 = compute_h2()                         # recompute (large-B path)

            a = _leaky_relu(h2 * scale_scr[...] + shift_scr[...])
            # Lane-dense logits: (1,128) x (tile_b,128)^T -> (1, tile_b)
            logit = lax.dot_general(
                w3_ref[...].astype(jnp.bfloat16), a.astype(jnp.bfloat16),
                (((1,), (1,)), ((), ())),
                preferred_element_type=jnp.float32)
            logit = logit + b3_ref[0, 0]                  # scalar bias from SMEM
            out_ref[...] = pl.reciprocal(1.0 + jnp.exp(-logit), approx=True)

    return kernel


def discriminator2_forward(x, params, *, tile_b=1024, resident_h2_budget=16 << 20):
    """x: (B, input_size) float32. Returns (B,) float32 sigmoid outputs."""
    w1t, b1, w2t, b2, gamma, beta, w3, b3 = params
    B, D = x.shape
    H1 = w1t.shape[1]
    H2 = w2t.shape[1]

    # Batch tile: multiple of 128 (lane-dense head output, clean bf16 packing);
    # clamp so a double-buffered f32 x tile stays modest in VMEM.
    tile_b = max(128, (tile_b // 128) * 128)
    max_rows = max(128, (((4 << 20) // (4 * D)) // 128) * 128)
    tile_b = min(tile_b, max_rows, _round_up(B, 128))
    b_pad = _round_up(B, tile_b)
    num_tiles = b_pad // tile_b
    needs_mask = b_pad != B

    # Keep h2 resident in VMEM when it fits; otherwise recompute it in phase 1.
    resident = b_pad * H2 * 4 <= resident_h2_budget

    kernel = _make_kernel(B=B, tile_b=tile_b, num_tiles=num_tiles,
                          resident=resident, needs_mask=needs_mask)

    # Resident path: phase 1 never reads x, so pin its block index to 0 there.
    x_index_map = ((lambda p, i: (i * (1 - p), 0)) if resident
                   else (lambda p, i: (i, 0)))
    const = lambda p, i: (0, 0)

    scratch_shapes = []
    if resident:
        scratch_shapes.append(pltpu.VMEM((b_pad, H2), jnp.float32))
    scratch_shapes += [pltpu.VMEM((1, H2), jnp.float32)] * 4   # sum, ssq, scale, shift

    passes = 1 if resident else 2
    weight_bytes = (D * H1 + H1 * H2) * 2 + (H1 + 5 * H2 + 1) * 4
    cost = pl.CostEstimate(
        flops=passes * 2 * b_pad * (D * H1 + H1 * H2) + 2 * b_pad * H2
              + 10 * b_pad * (H1 + H2),
        transcendentals=2 * b_pad,
        bytes_accessed=passes * b_pad * D * 4 + b_pad * 4 + weight_bytes)

    est_vmem = ((b_pad * H2 * 4 if resident else 0)
                + 2 * weight_bytes
                + 2 * tile_b * D * 4 + 2 * tile_b * 4 + 4 * H2 * 4)
    vmem_limit = int(min(max(32 << 20, est_vmem + (4 << 20)), 48 << 20))

    out = pl.pallas_call(
        kernel,
        grid=(2, num_tiles),                     # (phase, batch tile)
        out_shape=jax.ShapeDtypeStruct((1, b_pad), jnp.float32),
        in_specs=[
            pl.BlockSpec((tile_b, D), x_index_map),
            pl.BlockSpec((D, H1), const),
            pl.BlockSpec((1, H1), const),
            pl.BlockSpec((H1, H2), const),
            pl.BlockSpec((1, H2), const),
            pl.BlockSpec((1, H2), const),        # gamma
            pl.BlockSpec((1, H2), const),        # beta
            pl.BlockSpec((1, H2), const),        # w3 row
            pl.BlockSpec(memory_space=pltpu.MemorySpace.SMEM),   # b3 scalar
        ],
        out_specs=pl.BlockSpec((1, tile_b), lambda p, i: (0, i)),
        scratch_shapes=scratch_shapes,
        compiler_params=pltpu.CompilerParams(
            dimension_semantics=("arbitrary", "arbitrary"),
            vmem_limit_bytes=vmem_limit),
        cost_estimate=cost,
    )(x, w1t, b1, w2t, b2, gamma, beta, w3, b3)

    return out[0, :B]


def init_params(key, input_size, hidden_sizes=(256, 128)):
    """PyTorch-style init U(-1/sqrt(fan_in), 1/sqrt(fan_in)). Linear weights are
    stored pre-transposed (in_features, out_features); W1/W2 kept in bf16 for
    the MXU path; BatchNorm affine params start at gamma=1, beta=0."""
    h1, h2 = hidden_sizes
    keys = jax.random.split(key, 6)

    def lin(kw, kb, fan_in, fan_out):
        bound = 1.0 / jnp.sqrt(jnp.float32(fan_in))
        w = jax.random.uniform(kw, (fan_in, fan_out), jnp.float32, -bound, bound)
        b = jax.random.uniform(kb, (1, fan_out), jnp.float32, -bound, bound)
        return w, b

    w1t, b1 = lin(keys[0], keys[1], input_size, h1)
    w2t, b2 = lin(keys[2], keys[3], h1, h2)
    w3c, b3 = lin(keys[4], keys[5], h2, 1)
    gamma = jnp.ones((1, h2), jnp.float32)
    beta = jnp.zeros((1, h2), jnp.float32)
    w3 = w3c.T                                   # (1, h2) row for the head dot
    return (w1t.astype(jnp.bfloat16), b1,
            w2t.astype(jnp.bfloat16), b2,
            gamma, beta, w3, b3)


def reference_forward(x, params):
    """Pure-JAX reference with the same bf16-MXU / f32-accumulate numerics."""
    w1t, b1, w2t, b2, gamma, beta, w3, b3 = params
    xb = x.astype(jnp.bfloat16)
    h1 = jnp.dot(xb, w1t, preferred_element_type=jnp.float32) + b1
    h1 = jnp.where(h1 > 0, h1, LEAKY * h1)
    h2 = jnp.dot(h1.astype(jnp.bfloat16), w2t,
                 preferred_element_type=jnp.float32) + b2
    mean = jnp.mean(h2, axis=0, keepdims=True)
    var = jnp.maximum(jnp.mean(h2 * h2, axis=0, keepdims=True) - mean * mean, 0.0)
    a = gamma * (h2 - mean) / jnp.sqrt(var + BN_EPS) + beta
    a = jnp.where(a > 0, a, LEAKY * a)
    a16 = a.astype(jnp.bfloat16).astype(jnp.float32)
    w316 = w3.astype(jnp.bfloat16).astype(jnp.float32)
    logit = jnp.sum(a16 * w316, axis=1) + b3[0, 0]
    return jax.nn.sigmoid(logit)


if __name__ == "__main__":
    key = jax.random.PRNGKey(0)
    k_x, k_p = jax.random.split(key)

    batch = 200            # not a multiple of tile_b -> exercises last-tile masking
    input_size = 32
    x = jax.random.normal(k_x, (batch, input_size), jnp.float32)
    params = init_params(k_p, input_size)
    ref = reference_forward(x, params)

    # Fast path: h2 resident in VMEM, 2 batch tiles, ragged tail.
    out_resident = discriminator2_forward(x, params, tile_b=128)
    jax.block_until_ready(out_resident)
    assert out_resident.shape == (batch,)
    assert jnp.allclose(out_resident, ref, atol=2e-3, rtol=2e-3), (out_resident, ref)

    # Large-batch fallback path: force recompute of h2 in phase 1.
    out_recompute = discriminator2_forward(x, params, tile_b=128,
                                           resident_h2_budget=0)
    jax.block_until_ready(out_recompute)
    assert jnp.allclose(out_recompute, ref, atol=2e-3, rtol=2e-3), (out_recompute, ref)

    print("KERNEL_OK")
</pallas_src>

<mosaic_0001>
module attributes {stable_mosaic.version = 11 : i64} {
  func.func @kernel(%arg0: i32, %arg1: i32, %arg2: memref<128x32xf32, #tpu.memory_space<vmem>>, %arg3: memref<32x256xbf16, #tpu.memory_space<vmem>>, %arg4: memref<1x256xf32, #tpu.memory_space<vmem>>, %arg5: memref<256x128xbf16, #tpu.memory_space<vmem>>, %arg6: memref<1x128xf32, #tpu.memory_space<vmem>>, %arg7: memref<1x128xf32, #tpu.memory_space<vmem>>, %arg8: memref<1x128xf32, #tpu.memory_space<vmem>>, %arg9: memref<1x128xf32, #tpu.memory_space<vmem>>, %arg10: memref<1x1xf32, #tpu.memory_space<smem>>, %arg11: memref<1x128xf32, #tpu.memory_space<vmem>>, %arg12: memref<256x128xf32, #tpu.memory_space<vmem>>, %arg13: memref<1x128xf32, #tpu.memory_space<vmem>>, %arg14: memref<1x128xf32, #tpu.memory_space<vmem>>, %arg15: memref<1x128xf32, #tpu.memory_space<vmem>>, %arg16: memref<1x128xf32, #tpu.memory_space<vmem>>) attributes {dimension_semantics = [#tpu.dimension_semantics<arbitrary>, #tpu.dimension_semantics<arbitrary>], iteration_bounds = array<i64: 2, 2>, scalar_prefetch = 0 : i64, scratch_operands = 5 : i64, tpu.core_type = #tpu.core_type<tc>, window_params = [{transform_indices = @transform_0, window_bounds = array<i64: 128, 32>}, {pipeline_mode = #tpu.pipeline_mode<synchronous>, transform_indices = @transform_1, window_bounds = array<i64: 32, 256>}, {pipeline_mode = #tpu.pipeline_mode<synchronous>, transform_indices = @transform_2, window_bounds = array<i64: 1, 256>}, {pipeline_mode = #tpu.pipeline_mode<synchronous>, transform_indices = @transform_3, window_bounds = array<i64: 256, 128>}, {pipeline_mode = #tpu.pipeline_mode<synchronous>, transform_indices = @transform_4, window_bounds = array<i64: 1, 128>}, {pipeline_mode = #tpu.pipeline_mode<synchronous>, transform_indices = @transform_5, window_bounds = array<i64: 1, 128>}, {pipeline_mode = #tpu.pipeline_mode<synchronous>, transform_indices = @transform_6, window_bounds = array<i64: 1, 128>}, {pipeline_mode = #tpu.pipeline_mode<synchronous>, transform_indices = @transform_7, window_bounds = array<i64: 1, 128>}, {transform_indices = @transform_8, window_bounds = array<i64: 1, 1>}, {transform_indices = @transform_9, window_bounds = array<i64: 1, 128>}]} {
    %c128_i32 = arith.constant 128 : i32
    %0 = arith.muli %arg1, %c128_i32 : i32
    %1 = tpu.assume_multiple %0, 128 : i32
    %c0_i32 = arith.constant 0 : i32
    %2 = arith.cmpi eq, %arg0, %c0_i32 : i32
    %3 = arith.extui %2 : i1 to i32
    %c0_i32_0 = arith.constant 0 : i32
    %4 = arith.cmpi ne, %3, %c0_i32_0 : i32
    scf.if %4 {
      %c0_i32_2 = arith.constant 0 : i32
      %8 = arith.cmpi eq, %arg1, %c0_i32_2 : i32
      %9 = arith.extui %8 : i1 to i32
      %c0_i32_3 = arith.constant 0 : i32
      %10 = arith.cmpi ne, %9, %c0_i32_3 : i32
      scf.if %10 {
        %cst_21 = arith.constant 0.000000e+00 : f32
        %37 = vector.broadcast %cst_21 : f32 to vector<1x128xf32>
        %c0_22 = arith.constant 0 : index
        %c0_23 = arith.constant 0 : index
        %38 = vector.load %arg13[%c0_22, %c0_23] : memref<1x128xf32, #tpu.memory_space<vmem>>, vector<1x128xf32>
        tpu.vector_store %arg13[%c0_22, %c0_23], %37 {strides = array<i32>} : memref<1x128xf32, #tpu.memory_space<vmem>>, vector<1x128xf32>,
        %cst_24 = arith.constant 0.000000e+00 : f32
        %39 = vector.broadcast %cst_24 : f32 to vector<1x128xf32>
        %c0_25 = arith.constant 0 : index
        %c0_26 = arith.constant 0 : index
        %40 = vector.load %arg14[%c0_25, %c0_26] : memref<1x128xf32, #tpu.memory_space<vmem>>, vector<1x128xf32>
        tpu.vector_store %arg14[%c0_25, %c0_26], %39 {strides = array<i32>} : memref<1x128xf32, #tpu.memory_space<vmem>>, vector<1x128xf32>,
      } else {
      }
      %c0 = arith.constant 0 : index
      %c0_4 = arith.constant 0 : index
      %11 = vector.load %arg2[%c0, %c0_4] : memref<128x32xf32, #tpu.memory_space<vmem>>, vector<128x32xf32>
      %12 = arith.truncf %11 : vector<128x32xf32> to vector<128x32xbf16>
      %c0_5 = arith.constant 0 : index
      %c0_6 = arith.constant 0 : index
      %13 = vector.load %arg3[%c0_5, %c0_6] : memref<32x256xbf16, #tpu.memory_space<vmem>>, vector<32x256xbf16>
      %cst = arith.constant dense<0.000000e+00> : vector<128x256xf32>
      %14 = tpu.matmul %12, %13, %cst {dimension_numbers = #tpu.dot_dimension_numbers<[1], [0], [0], [1], [0, 0, 1, 1], [], []>} : vector<128x32xbf16>, vector<32x256xbf16>, vector<128x256xf32> -> vector<128x256xf32>
      %c0_7 = arith.constant 0 : index
      %c0_8 = arith.constant 0 : index
      %15 = vector.load %arg4[%c0_7, %c0_8] : memref<1x256xf32, #tpu.memory_space<vmem>>, vector<1x256xf32>
      %16 = vector.broadcast %15 : vector<1x256xf32> to vector<128x256xf32>
      %17 = arith.addf %14, %16 : vector<128x256xf32>
      %cst_9 = arith.constant 0.000000e+00 : f32
      %18 = vector.broadcast %cst_9 : f32 to vector<128x256xf32>
      %19 = arith.cmpf ogt, %17, %18 : vector<128x256xf32>
      %cst_10 = arith.constant 2.000000e-01 : f32
      %20 = vector.broadcast %cst_10 : f32 to vector<128x256xf32>
      %21 = arith.mulf %20, %17 : vector<128x256xf32>
      %22 = arith.select %19, %17, %21 : vector<128x256xi1>, vector<128x256xf32>
      %23 = arith.truncf %22 : vector<128x256xf32> to vector<128x256xbf16>
      %c0_11 = arith.constant 0 : index
      %c0_12 = arith.constant 0 : index
      %24 = vector.load %arg5[%c0_11, %c0_12] : memref<256x128xbf16, #tpu.memory_space<vmem>>, vector<256x128xbf16>
      %cst_13 = arith.constant dense<0.000000e+00> : vector<128x128xf32>
      %25 = tpu.matmul %23, %24, %cst_13 {dimension_numbers = #tpu.dot_dimension_numbers<[1], [0], [0], [1], [0, 0, 1, 1], [], []>} : vector<128x256xbf16>, vector<256x128xbf16>, vector<128x128xf32> -> vector<128x128xf32>
      %c0_14 = arith.constant 0 : index
      %c0_15 = arith.constant 0 : index
      %26 = vector.load %arg6[%c0_14, %c0_15] : memref<1x128xf32, #tpu.memory_space<vmem>>, vector<1x128xf32>
      %27 = vector.broadcast %26 : vector<1x128xf32> to vector<128x128xf32>
      %28 = arith.addf %25, %27 : vector<128x128xf32>
      %29 = arith.index_cast %1 : i32 to index
      %c0_16 = arith.constant 0 : index
      %30 = vector.load %arg12[%29, %c0_16] : memref<256x128xf32, #tpu.memory_space<vmem>>, vector<128x128xf32>
      tpu.vector_store %arg12[%29, %c0_16], %28 {strides = array<i32>} : memref<256x128xf32, #tpu.memory_space<vmem>>, vector<128x128xf32>,
      %c1_i32_17 = arith.constant 1 : i32
      %31 = arith.cmpi eq, %arg1, %c1_i32_17 : i32
      %32 = arith.extui %31 : i1 to i32
      %c0_i32_18 = arith.constant 0 : i32
      %33 = arith.cmpi ne, %32, %c0_i32_18 : i32
      scf.if %33 {
        %37 = tpu.iota {dimensions = array<i32: 0>} : vector<128x1xi32>
        %38 = vector.broadcast %1 : i32 to vector<128x1xi32>
        %39 = arith.addi %38, %37 : vector<128x1xi32>
        %c200_i32 = arith.constant 200 : i32
        %40 = vector.broadcast %c200_i32 : i32 to vector<128x1xi32>
        %41 = arith.cmpi slt, %39, %40 : vector<128x1xi32>
        %cst_21 = arith.constant 0.000000e+00 : f32
        %42 = vector.shape_cast %41 : vector<128x1xi1> to vector<128x1xi1>
        %43 = vector.broadcast %42 : vector<128x1xi1> to vector<128x128xi1>
        %44 = vector.broadcast %cst_21 : f32 to vector<128x128xf32>
        %45 = arith.select %43, %28, %44 : vector<128x128xi1>, vector<128x128xf32>
        %c0_22 = arith.constant 0 : index
        %c0_23 = arith.constant 0 : index
        %46 = vector.load %arg13[%c0_22, %c0_23] : memref<1x128xf32, #tpu.memory_space<vmem>>, vector<1x128xf32>
        %cst_24 = arith.constant dense<0.000000e+00> : vector<128xf32>
        %47 = vector.multi_reduction <add>, %45, %cst_24 [0] : vector<128x128xf32> to vector<128xf32>
        %48 = vector.shape_cast %47 : vector<128xf32> to vector<1x128xf32>
        %49 = arith.addf %46, %48 : vector<1x128xf32>
        %c0_25 = arith.constant 0 : index
        %c0_26 = arith.constant 0 : index
        %50 = vector.load %arg13[%c0_25, %c0_26] : memref<1x128xf32, #tpu.memory_space<vmem>>, vector<1x128xf32>
        tpu.vector_store %arg13[%c0_25, %c0_26], %49 {strides = array<i32>} : memref<1x128xf32, #tpu.memory_space<vmem>>, vector<1x128xf32>,
        %c0_27 = arith.constant 0 : index
        %c0_28 = arith.constant 0 : index
        %51 = vector.load %arg14[%c0_27, %c0_28] : memref<1x128xf32, #tpu.memory_space<vmem>>, vector<1x128xf32>
        %52 = arith.mulf %45, %45 : vector<128x128xf32>
        %cst_29 = arith.constant dense<0.000000e+00> : vector<128xf32>
        %53 = vector.multi_reduction <add>, %52, %cst_29 [0] : vector<128x128xf32> to vector<128xf32>
        %54 = vector.shape_cast %53 : vector<128xf32> to vector<1x128xf32>
        %55 = arith.addf %51, %54 : vector<1x128xf32>
        %c0_30 = arith.constant 0 : index
        %c0_31 = arith.constant 0 : index
        %56 = vector.load %arg14[%c0_30, %c0_31] : memref<1x128xf32, #tpu.memory_space<vmem>>, vector<1x128xf32>
        tpu.vector_store %arg14[%c0_30, %c0_31], %55 {strides = array<i32>} : memref<1x128xf32, #tpu.memory_space<vmem>>, vector<1x128xf32>,
      } else {
      }
      %c1_i32_19 = arith.constant 1 : i32
      %34 = arith.cmpi ne, %arg1, %c1_i32_19 : i32
      %35 = arith.extui %34 : i1 to i32
      %c0_i32_20 = arith.constant 0 : i32
      %36 = arith.cmpi ne, %35, %c0_i32_20 : i32
      scf.if %36 {
        %c0_21 = arith.constant 0 : index
        %c0_22 = arith.constant 0 : index
        %37 = vector.load %arg13[%c0_21, %c0_22] : memref<1x128xf32, #tpu.memory_space<vmem>>, vector<1x128xf32>
        %cst_23 = arith.constant dense<0.000000e+00> : vector<128xf32>
        %38 = vector.multi_reduction <add>, %28, %cst_23 [0] : vector<128x128xf32> to vector<128xf32>
        %39 = vector.shape_cast %38 : vector<128xf32> to vector<1x128xf32>
        %40 = arith.addf %37, %39 : vector<1x128xf32>
        %c0_24 = arith.constant 0 : index
        %c0_25 = arith.constant 0 : index
        %41 = vector.load %arg13[%c0_24, %c0_25] : memref<1x128xf32, #tpu.memory_space<vmem>>, vector<1x128xf32>
        tpu.vector_store %arg13[%c0_24, %c0_25], %40 {strides = array<i32>} : memref<1x128xf32, #tpu.memory_space<vmem>>, vector<1x128xf32>,
        %c0_26 = arith.constant 0 : index
        %c0_27 = arith.constant 0 : index
        %42 = vector.load %arg14[%c0_26, %c0_27] : memref<1x128xf32, #tpu.memory_space<vmem>>, vector<1x128xf32>
        %43 = arith.mulf %28, %28 : vector<128x128xf32>
        %cst_28 = arith.constant dense<0.000000e+00> : vector<128xf32>
        %44 = vector.multi_reduction <add>, %43, %cst_28 [0] : vector<128x128xf32> to vector<128xf32>
        %45 = vector.shape_cast %44 : vector<128xf32> to vector<1x128xf32>
        %46 = arith.addf %42, %45 : vector<1x128xf32>
        %c0_29 = arith.constant 0 : index
        %c0_30 = arith.constant 0 : index
        %47 = vector.load %arg14[%c0_29, %c0_30] : memref<1x128xf32, #tpu.memory_space<vmem>>, vector<1x128xf32>
        tpu.vector_store %arg14[%c0_29, %c0_30], %46 {strides = array<i32>} : memref<1x128xf32, #tpu.memory_space<vmem>>, vector<1x128xf32>,
      } else {
      }
    } else {
    }
    %c1_i32 = arith.constant 1 : i32
    %5 = arith.cmpi eq, %arg0, %c1_i32 : i32
    %6 = arith.extui %5 : i1 to i32
    %c0_i32_1 = arith.constant 0 : i32
    %7 = arith.cmpi ne, %6, %c0_i32_1 : i32
    scf.if %7 {
      %c0_i32_2 = arith.constant 0 : i32
      %8 = arith.cmpi eq, %arg1, %c0_i32_2 : i32
      %9 = arith.extui %8 : i1 to i32
      %c0_i32_3 = arith.constant 0 : i32
      %10 = arith.cmpi ne, %9, %c0_i32_3 : i32
      scf.if %10 {
        %c0_18 = arith.constant 0 : index
        %c0_19 = arith.constant 0 : index
        %38 = vector.load %arg13[%c0_18, %c0_19] : memref<1x128xf32, #tpu.memory_space<vmem>>, vector<1x128xf32>
        %cst_20 = arith.constant 5.000000e-03 : f32
        %39 = vector.broadcast %cst_20 : f32 to vector<1x128xf32>
        %40 = arith.mulf %38, %39 : vector<1x128xf32>
        %c0_21 = arith.constant 0 : index
        %c0_22 = arith.constant 0 : index
        %41 = vector.load %arg14[%c0_21, %c0_22] : memref<1x128xf32, #tpu.memory_space<vmem>>, vector<1x128xf32>
        %cst_23 = arith.constant 5.000000e-03 : f32
        %42 = vector.broadcast %cst_23 : f32 to vector<1x128xf32>
        %43 = arith.mulf %41, %42 : vector<1x128xf32>
        %44 = arith.mulf %40, %40 : vector<1x128xf32>
        %45 = arith.subf %43, %44 : vector<1x128xf32>
        %cst_24 = arith.constant 0.000000e+00 : f32
        %46 = vector.broadcast %cst_24 : f32 to vector<1x128xf32>
        %47 = arith.maximumf %45, %46 : vector<1x128xf32>
        %c0_25 = arith.constant 0 : index
        %c0_26 = arith.constant 0 : index
        %48 = vector.load %arg7[%c0_25, %c0_26] : memref<1x128xf32, #tpu.memory_space<vmem>>, vector<1x128xf32>
        %cst_27 = arith.constant 9.99999974E-6 : f32
        %49 = vector.broadcast %cst_27 : f32 to vector<1x128xf32>
        %50 = arith.addf %47, %49 : vector<1x128xf32>
        %51 = math.rsqrt %50 : vector<1x128xf32>
        %52 = arith.mulf %48, %51 : vector<1x128xf32>
        %c0_28 = arith.constant 0 : index
        %c0_29 = arith.constant 0 : index
        %53 = vector.load %arg15[%c0_28, %c0_29] : memref<1x128xf32, #tpu.memory_space<vmem>>, vector<1x128xf32>
        tpu.vector_store %arg15[%c0_28, %c0_29], %52 {strides = array<i32>} : memref<1x128xf32, #tpu.memory_space<vmem>>, vector<1x128xf32>,
        %c0_30 = arith.constant 0 : index
        %c0_31 = arith.constant 0 : index
        %54 = vector.load %arg8[%c0_30, %c0_31] : memref<1x128xf32, #tpu.memory_space<vmem>>, vector<1x128xf32>
        %55 = arith.mulf %40, %52 : vector<1x128xf32>
        %56 = arith.subf %54, %55 : vector<1x128xf32>
        %c0_32 = arith.constant 0 : index
        %c0_33 = arith.constant 0 : index
        %57 = vector.load %arg16[%c0_32, %c0_33] : memref<1x128xf32, #tpu.memory_space<vmem>>, vector<1x128xf32>
        tpu.vector_store %arg16[%c0_32, %c0_33], %56 {strides = array<i32>} : memref<1x128xf32, #tpu.memory_space<vmem>>, vector<1x128xf32>,
      } else {
      }
      %11 = arith.index_cast %1 : i32 to index
      %c0 = arith.constant 0 : index
      %12 = vector.load %arg12[%11, %c0] : memref<256x128xf32, #tpu.memory_space<vmem>>, vector<128x128xf32>
      %c0_4 = arith.constant 0 : index
      %c0_5 = arith.constant 0 : index
      %13 = vector.load %arg15[%c0_4, %c0_5] : memref<1x128xf32, #tpu.memory_space<vmem>>, vector<1x128xf32>
      %14 = vector.broadcast %13 : vector<1x128xf32> to vector<128x128xf32>
      %15 = arith.mulf %12, %14 : vector<128x128xf32>
      %c0_6 = arith.constant 0 : index
      %c0_7 = arith.constant 0 : index
      %16 = vector.load %arg16[%c0_6, %c0_7] : memref<1x128xf32, #tpu.memory_space<vmem>>, vector<1x128xf32>
      %17 = vector.broadcast %16 : vector<1x128xf32> to vector<128x128xf32>
      %18 = arith.addf %15, %17 : vector<128x128xf32>
      %cst = arith.constant 0.000000e+00 : f32
      %19 = vector.broadcast %cst : f32 to vector<128x128xf32>
      %20 = arith.cmpf ogt, %18, %19 : vector<128x128xf32>
      %cst_8 = arith.constant 2.000000e-01 : f32
      %21 = vector.broadcast %cst_8 : f32 to vector<128x128xf32>
      %22 = arith.mulf %21, %18 : vector<128x128xf32>
      %23 = arith.select %20, %18, %22 : vector<128x128xi1>, vector<128x128xf32>
      %c0_9 = arith.constant 0 : index
      %c0_10 = arith.constant 0 : index
      %24 = vector.load %arg9[%c0_9, %c0_10] : memref<1x128xf32, #tpu.memory_space<vmem>>, vector<1x128xf32>
      %25 = arith.truncf %24 : vector<1x128xf32> to vector<1x128xbf16>
      %26 = arith.truncf %23 : vector<128x128xf32> to vector<128x128xbf16>
      %cst_11 = arith.constant dense<0.000000e+00> : vector<1x128xf32>
      %27 = tpu.matmul %25, %26, %cst_11 {dimension_numbers = #tpu.dot_dimension_numbers<[1], [1], [0], [0], [0, 0, 1, 0], [], []>} : vector<1x128xbf16>, vector<128x128xbf16>, vector<1x128xf32> -> vector<1x128xf32>
      %c0_12 = arith.constant 0 : index
      %c0_13 = arith.constant 0 : index
      %28 = memref.load %arg10[%c0_12, %c0_13] : memref<1x1xf32, #tpu.memory_space<smem>>
      %29 = vector.broadcast %28 : f32 to vector<1x128xf32>
      %30 = arith.addf %27, %29 : vector<1x128xf32>
      %cst_14 = arith.constant 0.000000e+00 : f32
      %31 = vector.broadcast %cst_14 : f32 to vector<1x128xf32>
      %32 = arith.subf %31, %30 : vector<1x128xf32>
      %33 = math.exp %32 : vector<1x128xf32>
      %cst_15 = arith.constant 1.000000e+00 : f32
      %34 = vector.broadcast %cst_15 : f32 to vector<1x128xf32>
      %35 = arith.addf %34, %33 : vector<1x128xf32>
      %36 = tpu.reciprocal %35 {approx = true} : vector<1x128xf32> -> vector<1x128xf32>
      %c0_16 = arith.constant 0 : index
      %c0_17 = arith.constant 0 : index
      %37 = vector.load %arg11[%c0_16, %c0_17] : memref<1x128xf32, #tpu.memory_space<vmem>>, vector<1x128xf32>
      tpu.vector_store %arg11[%c0_16, %c0_17], %36 {strides = array<i32>} : memref<1x128xf32, #tpu.memory_space<vmem>>, vector<1x128xf32>,
    } else {
    }
    return
  }
  func.func @transform_0(%arg0: i32, %arg1: i32) -> (i32, i32) {
    %c1_i32 = arith.constant 1 : i32
    %0 = arith.subi %c1_i32, %arg0 : i32
    %1 = arith.muli %arg1, %0 : i32
    %c0_i32 = arith.constant 0 : i32
    %c0_i32_0 = arith.constant 0 : i32
    return %1, %c0_i32 : i32, i32
  }
  func.func @transform_1(%arg0: i32, %arg1: i32) -> (i32, i32) {
    %c0_i32 = arith.constant 0 : i32
    %c0_i32_0 = arith.constant 0 : i32
    %c0_i32_1 = arith.constant 0 : i32
    return %c0_i32, %c0_i32_0 : i32, i32
  }
  func.func @transform_2(%arg0: i32, %arg1: i32) -> (i32, i32) {
    %c0_i32 = arith.constant 0 : i32
    %c0_i32_0 = arith.constant 0 : i32
    %c0_i32_1 = arith.constant 0 : i32
    return %c0_i32, %c0_i32_0 : i32, i32
  }
  func.func @transform_3(%arg0: i32, %arg1: i32) -> (i32, i32) {
    %c0_i32 = arith.constant 0 : i32
    %c0_i32_0 = arith.constant 0 : i32
    %c0_i32_1 = arith.constant 0 : i32
    return %c0_i32, %c0_i32_0 : i32, i32
  }
  func.func @transform_4(%arg0: i32, %arg1: i32) -> (i32, i32) {
    %c0_i32 = arith.constant 0 : i32
    %c0_i32_0 = arith.constant 0 : i32
    %c0_i32_1 = arith.constant 0 : i32
    return %c0_i32, %c0_i32_0 : i32, i32
  }
  func.func @transform_5(%arg0: i32, %arg1: i32) -> (i32, i32) {
    %c0_i32 = arith.constant 0 : i32
    %c0_i32_0 = arith.constant 0 : i32
    %c0_i32_1 = arith.constant 0 : i32
    return %c0_i32, %c0_i32_0 : i32, i32
  }
  func.func @transform_6(%arg0: i32, %arg1: i32) -> (i32, i32) {
    %c0_i32 = arith.constant 0 : i32
    %c0_i32_0 = arith.constant 0 : i32
    %c0_i32_1 = arith.constant 0 : i32
    return %c0_i32, %c0_i32_0 : i32, i32
  }
  func.func @transform_7(%arg0: i32, %arg1: i32) -> (i32, i32) {
    %c0_i32 = arith.constant 0 : i32
    %c0_i32_0 = arith.constant 0 : i32
    %c0_i32_1 = arith.constant 0 : i32
    return %c0_i32, %c0_i32_0 : i32, i32
  }
  func.func @transform_8(%arg0: i32, %arg1: i32) -> (i32, i32) {
    %c0_i32 = arith.constant 0 : i32
    %c0_i32_0 = arith.constant 0 : i32
    %c0_i32_1 = arith.constant 0 : i32
    return %c0_i32, %c0_i32_0 : i32, i32
  }
  func.func @transform_9(%arg0: i32, %arg1: i32) -> (i32, i32) {
    %c0_i32 = arith.constant 0 : i32
    %c0_i32_0 = arith.constant 0 : i32
    return %c0_i32, %arg1 : i32, i32
  }
}

</mosaic_0001>

<llo_original>
// kernel: tpu_custom_call.1
$region0: #{tpu_custom_call.1}
  #allocation0 [shape = 'u32[]', space=smem, size = 0x4, offset = 0x4, fixed_abs, tag = 'smem constant byte address 0x4 - core index']
  #allocation1 [shape = 'u32[72,128]{1,0:T(1,128)}', space=vmem, size = 0x9000, scoped, tag = 'internal scratch']
  #allocation2 [shape = 'f32[256,128]{1,0:T(8,128)}', space=vmem, size = 0x20000, scoped, tag = 'scratch operand']
  #allocation3 [shape = 'f32[1,128]{1,0:T(1,128)}', space=vmem, size = 0x200, scoped, tag = 'scratch operand']
  #allocation4 [shape = 'f32[1,128]{1,0:T(1,128)}', space=vmem, size = 0x200, scoped, tag = 'scratch operand']
  #allocation5 [shape = 'f32[1,128]{1,0:T(1,128)}', space=vmem, size = 0x200, scoped, tag = 'scratch operand']
  #allocation6 [shape = 'f32[1,128]{1,0:T(1,128)}', space=vmem, size = 0x200, scoped, tag = 'scratch operand']
  #allocation7 [shape = 'f32[1,1]{1,0:T(1,128)S(6)}', space=smem, size = 0x200, scoped, tag = 'scoped memory for tpu_custom_call.1']
  %s0 = inlined_call_operand.vmem [shape: f32[200,32], index: 0, kind: input, shape index: {}]
  %s1 = inlined_call_operand.vmem [shape: bf16[32,256], index: 1, kind: input, shape index: {}]
  %s2 = inlined_call_operand.vmem [shape: f32[1,256], index: 2, kind: input, shape index: {}]
  %s3 = inlined_call_operand.vmem [shape: bf16[256,128], index: 3, kind: input, shape index: {}]
  %s4 = inlined_call_operand.vmem [shape: f32[1,128], index: 4, kind: input, shape index: {}]
  %s5 = inlined_call_operand.vmem [shape: f32[1,128], index: 5, kind: input, shape index: {}]
  %s6 = inlined_call_operand.vmem [shape: f32[1,128], index: 6, kind: input, shape index: {}]
  %s7 = inlined_call_operand.vmem [shape: f32[1,128], index: 7, kind: input, shape index: {}]
  %s8 = inlined_call_operand.<no memory space> [shape: f32[1,1], index: 8, kind: input, shape index: {}]
  %s9 = inlined_call_operand.hbm [shape: f32[1,256], index: 9, kind: output, shape index: {}]
  %s10 = sld [smem:[#allocation0]]
  $region93: #{tpu_custom_call.1} parent=0
    _
  %s12 = ssub.s32 1, %s10
  %s13 = scalar_select 0, %s12, %s10
  %14 = sst [smem:[#allocation7]] %s8
  $region1: #{tpu_custom_call.1} parent=0
    #allocation8 [shape = 'u8[1024]{0}', space=vmem, size = 0x400, scoped, tag = 'output window, operand 0']
    #allocation9 [shape = 's32[2]{0}', space=sflag, size = 0x8, scoped, tag = 'scoped memory for tpu_custom_call.1']
    %15 = vsyncpa [#allocation9], 0
    %s16 = scalar_lea.sflag [#allocation9], 1
    %17 = vsyncpa %s16, 0
    loop: start=0, step=1, limit=6
    $region2: #{tpu_custom_call.1} parent=1 // loop_pre_header
      _
    $region3: #{tpu_custom_call.1} parent=1 // loop_header
      %s19 = sphi 0, %s23
      %p20 = scmp.ge.s32.totalorder %s19, 6
      %s26 = sphi 0, %s38
      %s27 = sphi 0, %s34
      %s28 = sphi 0, %s26
      %s29 = sphi 0, %s27
      %s30 = sphi 0, %s28
      %s31 = sphi 0, %s29
      %s45 = sphi 0, %s47
      %s48 = sphi 0, %s45
      %s49 = sphi 0, %s48
      %s65 = sphi 0, %s49
      %s69 = sphi 0, %s69
      %s71 = sphi 0, %s69
      %s72 = sphi 0, %s71
      %s86 = sphi 0, %s72
      %s90 = sphi 0, %s90
      %s92 = sphi 0, %s90
      %s93 = sphi 0, %s92
      %s107 = sphi 0, %s93
      %s111 = sphi 0, %s111
      %s113 = sphi 0, %s111
      %s114 = sphi 0, %s113
      %s128 = sphi 0, %s114
      %s132 = sphi 0, %s132
      %s134 = sphi 0, %s132
      %s135 = sphi 0, %s134
      %s149 = sphi 0, %s135
      %s153 = sphi 0, %s153
      %s155 = sphi 0, %s153
      %s156 = sphi 0, %s155
      %s170 = sphi 0, %s156
      %s174 = sphi 0, %s174
      %s176 = sphi 0, %s174
      %s177 = sphi 0, %s176
      %s191 = sphi 0, %s177
      %s195 = sphi 0, %s195
      %s197 = sphi 0, %s195
      %s198 = sphi 0, %s197
      %s212 = sphi 0, %s198
      %s216 = sphi 0, %s216
      %s218 = sphi 0, %s216
      %s219 = sphi 0, %s218
      %s233 = sphi 0, %s219
      %s239 = sphi 0, %s241
      %s242 = sphi 0, %s239
      %s243 = sphi 0, %s242
      %s259 = sphi 0, %s243
    $region4: #{tpu_custom_call.1} parent=1 // loop_header_branch
      %22 = sbr.rel (%p20) target = $region8
    $region5: #{tpu_custom_call.1} parent=1 // loop_body
      %s24 = ssub.s32 %s19, 1
      %s25 = ssub.s32 %s19, 2
      %s32 = sadd.s32 1, %s27
      %p33 = scmp.ge.s32.totalorder %s32, 2
      %s34 = scalar_select %p33, 0, %s32
      %s35 = sadd.s32 1, %s26
      %s36 = scalar_select %p33, %s35, %s26
      %p37 = scmp.ge.s32.totalorder %s36, 2
      %s38 = scalar_select %p37, 0, %s36
      %s39 = ssub.s32 1, %s26
      %s40 = smul.u32 %s27, %s39
      %s41 = ssub.s32 1, %s38
      %s42 = smul.u32 %s34, %s41
      %s43 = ssub.s32 %s40, %s42
      %p44 = scmp.eq.s32.totalorder %s43, 0
      %s46 = sadd.s32 %s45, 1
      %s47 = scalar_select %p44, %s45, %s46
      %p50 = pneg %p44
      %p51 = scmp.eq.s32.totalorder %s19, 3
      %p52 = por %p50, %p51
      %p53 = scmp.ne.s32.totalorder %s45, %s48
      %p54 = scmp.eq.s32.totalorder %s19, 0
      %p55 = por %p53, %p54
      %p56 = scmp.ne.s32.totalorder %s45, %s48
      %p57 = scmp.eq.s32.totalorder %s24, 3
      %p58 = por %p56, %p57
      %p59 = scmp.ne.s32.totalorder %s48, %s49
      %p60 = scmp.eq.s32.totalorder %s24, 0
      %p61 = por %p59, %p60
      %p62 = scmp.ne.s32.totalorder %s48, %s49
      %p63 = scmp.eq.s32.totalorder %s25, 3
      %p64 = por %p62, %p63
      %p66 = scmp.ne.s32.totalorder %s49, %s65
      %p67 = scmp.eq.s32.totalorder %s25, 0
      %p68 = por %p66, %p67
      %s70 = sadd.s32 %s69, 1
      %p73 = scmp.eq.s32.totalorder %s19, 3
      %p74 = scmp.ne.s32.totalorder %s69, %s71
      %p75 = scmp.eq.s32.totalorder %s19, 0
      %p76 = por %p74, %p75
      %p77 = scmp.ne.s32.totalorder %s69, %s71
      %p78 = scmp.eq.s32.totalorder %s24, 3
      %p79 = por %p77, %p78
      %p80 = scmp.ne.s32.totalorder %s71, %s72
      %p81 = scmp.eq.s32.totalorder %s24, 0
      %p82 = por %p80, %p81
      %p83 = scmp.ne.s32.totalorder %s71, %s72
      %p84 = scmp.eq.s32.totalorder %s25, 3
      %p85 = por %p83, %p84
      %p87 = scmp.ne.s32.totalorder %s72, %s86
      %p88 = scmp.eq.s32.totalorder %s25, 0
      %p89 = por %p87, %p88
      %s91 = sadd.s32 %s90, 1
      %p94 = scmp.eq.s32.totalorder %s19, 3
      %p95 = scmp.ne.s32.totalorder %s90, %s92
      %p96 = scmp.eq.s32.totalorder %s19, 0
      %p97 = por %p95, %p96
      %p98 = scmp.ne.s32.totalorder %s90, %s92
      %p99 = scmp.eq.s32.totalorder %s24, 3
      %p100 = por %p98, %p99
      %p101 = scmp.ne.s32.totalorder %s92, %s93
      %p102 = scmp.eq.s32.totalorder %s24, 0
      %p103 = por %p101, %p102
      %p104 = scmp.ne.s32.totalorder %s92, %s93
      %p105 = scmp.eq.s32.totalorder %s25, 3
      %p106 = por %p104, %p105
      %p108 = scmp.ne.s32.totalorder %s93, %s107
      %p109 = scmp.eq.s32.totalorder %s25, 0
      %p110 = por %p108, %p109
      %s112 = sadd.s32 %s111, 1
      %p115 = scmp.eq.s32.totalorder %s19, 3
      %p116 = scmp.ne.s32.totalorder %s111, %s113
      %p117 = scmp.eq.s32.totalorder %s19, 0
      %p118 = por %p116, %p117
      %p119 = scmp.ne.s32.totalorder %s111, %s113
      %p120 = scmp.eq.s32.totalorder %s24, 3
      %p121 = por %p119, %p120
      %p122 = scmp.ne.s32.totalorder %s113, %s114
      %p123 = scmp.eq.s32.totalorder %s24, 0
      %p124 = por %p122, %p123
      %p125 = scmp.ne.s32.totalorder %s113, %s114
      %p126 = scmp.eq.s32.totalorder %s25, 3
      %p127 = por %p125, %p126
      %p129 = scmp.ne.s32.totalorder %s114, %s128
      %p130 = scmp.eq.s32.totalorder %s25, 0
      %p131 = por %p129, %p130
      %s133 = sadd.s32 %s132, 1
      %p136 = scmp.eq.s32.totalorder %s19, 3
      %p137 = scmp.ne.s32.totalorder %s132, %s134
      %p138 = scmp.eq.s32.totalorder %s19, 0
      %p139 = por %p137, %p138
      %p140 = scmp.ne.s32.totalorder %s132, %s134
      %p141 = scmp.eq.s32.totalorder %s24, 3
      %p142 = por %p140, %p141
      %p143 = scmp.ne.s32.totalorder %s134, %s135
      %p144 = scmp.eq.s32.totalorder %s24, 0
      %p145 = por %p143, %p144
      %p146 = scmp.ne.s32.totalorder %s134, %s135
      %p147 = scmp.eq.s32.totalorder %s25, 3
      %p148 = por %p146, %p147
      %p150 = scmp.ne.s32.totalorder %s135, %s149
      %p151 = scmp.eq.s32.totalorder %s25, 0
      %p152 = por %p150, %p151
      %s154 = sadd.s32 %s153, 1
      %p157 = scmp.eq.s32.totalorder %s19, 3
      %p158 = scmp.ne.s32.totalorder %s153, %s155
      %p159 = scmp.eq.s32.totalorder %s19, 0
      %p160 = por %p158, %p159
      %p161 = scmp.ne.s32.totalorder %s153, %s155
      %p162 = scmp.eq.s32.totalorder %s24, 3
      %p163 = por %p161, %p162
      %p164 = scmp.ne.s32.totalorder %s155, %s156
      %p165 = scmp.eq.s32.totalorder %s24, 0
      %p166 = por %p164, %p165
      %p167 = scmp.ne.s32.totalorder %s155, %s156
      %p168 = scmp.eq.s32.totalorder %s25, 3
      %p169 = por %p167, %p168
      %p171 = scmp.ne.s32.totalorder %s156, %s170
      %p172 = scmp.eq.s32.totalorder %s25, 0
      %p173 = por %p171, %p172
      %s175 = sadd.s32 %s174, 1
      %p178 = scmp.eq.s32.totalorder %s19, 3
      %p179 = scmp.ne.s32.totalorder %s174, %s176
      %p180 = scmp.eq.s32.totalorder %s19, 0
      %p181 = por %p179, %p180
      %p182 = scmp.ne.s32.totalorder %s174, %s176
      %p183 = scmp.eq.s32.totalorder %s24, 3
      %p184 = por %p182, %p183
      %p185 = scmp.ne.s32.totalorder %s176, %s177
      %p186 = scmp.eq.s32.totalorder %s24, 0
      %p187 = por %p185, %p186
      %p188 = scmp.ne.s32.totalorder %s176, %s177
      %p189 = scmp.eq.s32.totalorder %s25, 3
      %p190 = por %p188, %p189
      %p192 = scmp.ne.s32.totalorder %s177, %s191
      %p193 = scmp.eq.s32.totalorder %s25, 0
      %p194 = por %p192, %p193
      %s196 = sadd.s32 %s195, 1
      %p199 = scmp.eq.s32.totalorder %s19, 3
      %p200 = scmp.ne.s32.totalorder %s195, %s197
      %p201 = scmp.eq.s32.totalorder %s19, 0
      %p202 = por %p200, %p201
      %p203 = scmp.ne.s32.totalorder %s195, %s197
      %p204 = scmp.eq.s32.totalorder %s24, 3
      %p205 = por %p203, %p204
      %p206 = scmp.ne.s32.totalorder %s197, %s198
      %p207 = scmp.eq.s32.totalorder %s24, 0
      %p208 = por %p206, %p207
      %p209 = scmp.ne.s32.totalorder %s197, %s198
      %p210 = scmp.eq.s32.totalorder %s25, 3
      %p211 = por %p209, %p210
      %p213 = scmp.ne.s32.totalorder %s198, %s212
      %p214 = scmp.eq.s32.totalorder %s25, 0
      %p215 = por %p213, %p214
      %s217 = sadd.s32 %s216, 1
      %p220 = scmp.eq.s32.totalorder %s19, 3
      %p221 = scmp.ne.s32.totalorder %s216, %s218
      %p222 = scmp.eq.s32.totalorder %s19, 0
      %p223 = por %p221, %p222
      %p224 = scmp.ne.s32.totalorder %s216, %s218
      %p225 = scmp.eq.s32.totalorder %s24, 3
      %p226 = por %p224, %p225
      %p227 = scmp.ne.s32.totalorder %s218, %s219
      %p228 = scmp.eq.s32.totalorder %s24, 0
      %p229 = por %p227, %p228
      %p230 = scmp.ne.s32.totalorder %s218, %s219
      %p231 = scmp.eq.s32.totalorder %s25, 3
      %p232 = por %p230, %p231
      %p234 = scmp.ne.s32.totalorder %s219, %s233
      %p235 = scmp.eq.s32.totalorder %s25, 0
      %p236 = por %p234, %p235
      %s237 = ssub.s32 %s27, %s34
      %p238 = scmp.eq.s32.totalorder %s237, 0
      %s240 = sadd.s32 %s239, 1
      %s241 = scalar_select %p238, %s239, %s240
      %p244 = pneg %p238
      %p245 = scmp.eq.s32.totalorder %s19, 3
      %p246 = por %p244, %p245
      %p247 = scmp.ne.s32.totalorder %s239, %s242
      %p248 = scmp.eq.s32.totalorder %s19, 0
      %p249 = por %p247, %p248
      %p250 = scmp.ne.s32.totalorder %s239, %s242
      %p251 = scmp.eq.s32.totalorder %s24, 3
      %p252 = por %p250, %p251
      %p253 = scmp.ne.s32.totalorder %s242, %s243
      %p254 = scmp.eq.s32.totalorder %s24, 0
      %p255 = por %p253, %p254
      %p256 = scmp.ne.s32.totalorder %s242, %s243
      %p257 = scmp.eq.s32.totalorder %s25, 3
      %p258 = por %p256, %p257
      %p260 = scmp.ne.s32.totalorder %s243, %s259
      %p261 = scmp.eq.s32.totalorder %s25, 0
      %p262 = por %p260, %p261
      %p263 = scmp.le.s32.totalorder 1, %s19
      %p264 = scmp.lt.s32.totalorder %s19, 5
      %p265 = pnand %p263, %p264
      %p266 = pneg %p265
      // Predicated region
      $region9: #{tpu_custom_call.1} parent=5 // pred_check
        _
      $region10: #{tpu_custom_call.1} parent=5 // pred_check_branch
        %268 = sbr.rel (%p265) target = $region12
      $region11: #{tpu_custom_call.1} parent=5 // pred_region
        %s269 = ssub.s32 %s19, 1
        // Predicated region
        $region13: #{tpu_custom_call.1} parent=11 // pred_check
          %p270 = pneg %p82
        $region14: #{tpu_custom_call.1} parent=11 // pred_check_branch
          %272 = sbr.rel (%p270) target = $region16
        $region15: #{tpu_custom_call.1} parent=11 // pred_region
          _
        $region16: #{tpu_custom_call.1} parent=11 // pred_fallthru
          _
        // Predicated region
        $region17: #{tpu_custom_call.1} parent=11 // pred_check
          %p273 = pneg %p103
        $region18: #{tpu_custom_call.1} parent=11 // pred_check_branch
          %275 = sbr.rel (%p273) target = $region20
        $region19: #{tpu_custom_call.1} parent=11 // pred_region
          _
        $region20: #{tpu_custom_call.1} parent=11 // pred_fallthru
          _
        // Predicated region
        $region21: #{tpu_custom_call.1} parent=11 // pred_check
          %p276 = pneg %p124
        $region22: #{tpu_custom_call.1} parent=11 // pred_check_branch
          %278 = sbr.rel (%p276) target = $region24
        $region23: #{tpu_custom_call.1} parent=11 // pred_region
          _
        $region24: #{tpu_custom_call.1} parent=11 // pred_fallthru
          _
        // Predicated region
        $region25: #{tpu_custom_call.1} parent=11 // pred_check
          %p279 = pneg %p145
        $region26: #{tpu_custom_call.1} parent=11 // pred_check_branch
          %281 = sbr.rel (%p279) target = $region28
        $region27: #{tpu_custom_call.1} parent=11 // pred_region
          _
        $region28: #{tpu_custom_call.1} parent=11 // pred_fallthru
          _
        // Predicated region
        $region29: #{tpu_custom_call.1} parent=11 // pred_check
          %p282 = pneg %p166
        $region30: #{tpu_custom_call.1} parent=11 // pred_check_branch
          %284 = sbr.rel (%p282) target = $region32
        $region31: #{tpu_custom_call.1} parent=11 // pred_region
          _
        $region32: #{tpu_custom_call.1} parent=11 // pred_fallthru
          _
        // Predicated region
        $region33: #{tpu_custom_call.1} parent=11 // pred_check
          %p285 = pneg %p187
        $region34: #{tpu_custom_call.1} parent=11 // pred_check_branch
          %287 = sbr.rel (%p285) target = $region36
        $region35: #{tpu_custom_call.1} parent=11 // pred_region
          _
        $region36: #{tpu_custom_call.1} parent=11 // pred_fallthru
          _
        // Predicated region
        $region37: #{tpu_custom_call.1} parent=11 // pred_check
          %p288 = pneg %p208
        $region38: #{tpu_custom_call.1} parent=11 // pred_check_branch
          %290 = sbr.rel (%p288) target = $region40
        $region39: #{tpu_custom_call.1} parent=11 // pred_region
          _
        $region40: #{tpu_custom_call.1} parent=11 // pred_fallthru
          _
        // Predicated region
        $region41: #{tpu_custom_call.1} parent=11 // pred_check
          %p291 = pneg %p229
        $region42: #{tpu_custom_call.1} parent=11 // pred_check_branch
          %293 = sbr.rel (%p291) target = $region44
        $region43: #{tpu_custom_call.1} parent=11 // pred_region
          _
        $region44: #{tpu_custom_call.1} parent=11 // pred_fallthru
          _
      $region12: #{tpu_custom_call.1} parent=5 // pred_fallthru
        _
      %p294 = scmp.lt.s32.totalorder %s19, 4
      // Predicated region
      $region45: #{tpu_custom_call.1} parent=5 // pred_check
        %p295 = pneg %p294
      $region46: #{tpu_custom_call.1} parent=5 // pred_check_branch
        %297 = sbr.rel (%p295) target = $region48
      $region47: #{tpu_custom_call.1} parent=5 // pred_region
        // Predicated region
        $region49: #{tpu_custom_call.1} parent=47 // pred_check
          %p298 = pneg %p55
        $region50: #{tpu_custom_call.1} parent=47 // pred_check_branch
          %300 = sbr.rel (%p298) target = $region52
        $region51: #{tpu_custom_call.1} parent=47 // pred_region
          %s301 = ssub.s32 1, %s26
          %s302 = smul.u32 %s27, %s301
          %s303 = smul.u32 16, %s302
          %s304 = ssub.s32 25, %s303
          %p305 = scmp.lt.s32.totalorder %s304, 16
          %s306 = scalar_select %p305, %s304, 16
          %s307 = smul.u32 8, %s306
          %p308 = scmp.lt.s32.totalorder %s303, 24
          %s309 = scalar_select %p308, %s303, 24
          %s310 = smul.addr %s309, 8
          %s311 = scalar_lea.vmem %s0, %s310
          %s312 = ssub.s32 1, %s26
          %s313 = smul.u32 %s27, %s312
          %s314 = smul.u32 16, %s313
          %s315 = ssub.s32 25, %s314
          %p316 = scmp.lt.s32.totalorder %s315, 16
          %s317 = scalar_select %p316, %s315, 16
          %s318 = smul.u32 8, %s317
        $region52: #{tpu_custom_call.1} parent=47 // pred_fallthru
          _
      $region48: #{tpu_custom_call.1} parent=5 // pred_fallthru
        _
      %p319 = scmp.le.s32.totalorder 1, %s19
      %p320 = scmp.lt.s32.totalorder %s19, 5
      %p321 = pnand %p319, %p320
      %p322 = pneg %p321
      // Predicated region
      $region53: #{tpu_custom_call.1} parent=5 // pred_check
        _
      $region54: #{tpu_custom_call.1} parent=5 // pred_check_branch
        %324 = sbr.rel (%p321) target = $region56
      $region55: #{tpu_custom_call.1} parent=5 // pred_region
        %s325 = ssub.s32 %s19, 1
        %s326 = ssub.s32 1, %s28
        %s327 = smul.u32 %s29, %s326
        %s328 = smul.u32 16, %s327
        %s329 = ssub.s32 25, %s328
        %p330 = scmp.lt.s32.totalorder %s329, 16
        %s331 = scalar_select %p330, %s329, 16
        %s332 = smul.u32 8, %s331
        %p333 = scmp.lt.s32.totalorder %s328, 24
        %s334 = scalar_select %p333, %s328, 24
        %s335 = smul.addr %s334, 8
        %s336 = scalar_lea.vmem %s0, %s335
        %p337 = pneg %p61
        %p338 = pneg %p58
        %p339 = pneg %p82
        %p340 = pneg %p79
        %p341 = pneg %p103
        %p342 = pneg %p100
        %p343 = pneg %p124
        %p344 = pneg %p121
        %p345 = pneg %p145
        %p346 = pneg %p142
        %p347 = pneg %p166
        %p348 = pneg %p163
        %p349 = pneg %p187
        %p350 = pneg %p184
        %p351 = pneg %p208
        %p352 = pneg %p205
        %p353 = pneg %p229
        %p354 = pneg %p226
        %p355 = pneg %p255
        %p356 = pneg %p252
        %s357 = sand.u32 %s242, 1
        %s358 = scalar_lea.sflag [#allocation9], %s357
        %s359 = sand.u32 %s242, 1
        %s360 = scalar_lea.vmem [#allocation8], %s359
        %s361 = ssub.s32 1, %s28
        %s362 = smul.u32 %s29, %s361
        %s363 = smul.u32 16, %s362
        %s364 = ssub.s32 25, %s363
        %p365 = scmp.lt.s32.totalorder %s364, 16
        %s366 = scalar_select %p365, %s364, 16
        %s367 = smul.u32 8, %s366
        %p368 = scmp.lt.s32.totalorder %s363, 24
        %s369 = scalar_select %p368, %s363, 24
        %s370 = smul.addr %s369, 8
        %s371 = scalar_lea.vmem %s0, %s370
        %s372 = ssub.s32 1, %s28
        %s373 = smul.u32 %s29, %s372
        %s374 = smul.u32 16, %s373
        %s375 = ssub.s32 25, %s374
        %p376 = scmp.lt.s32.totalorder %s375, 16
        %s377 = scalar_select %p376, %s375, 16
        %s378 = smul.u32 8, %s377
        %s380 = smul.u32 %s29, 128
        %p381 = scmp.eq.s32.totalorder %s28, 0
        // Predicated region
        $region57: #{tpu_custom_call.1} parent=55 // pred_check
          %p382 = pneg %p381
        $region58: #{tpu_custom_call.1} parent=55 // pred_check_branch
          %384 = sbr.rel (%p382) target = $region60
        $region59: #{tpu_custom_call.1} parent=55 // pred_region
          %p385 = scmp.eq.s32.totalorder %s29, 0
          // Predicated region
          $region61: #{tpu_custom_call.1} parent=59 // pred_check
            %p386 = pneg %p385
          $region62: #{tpu_custom_call.1} parent=59 // pred_check_branch
            %388 = sbr.rel (%p386) target = $region64
          $region63: #{tpu_custom_call.1} parent=59 // pred_region
            %389 = vst [vmem:[#allocation3] sm:$0x1] 0.0
            %390 = vst [vmem:[#allocation4] sm:$0x1] 0.0
          $region64: #{tpu_custom_call.1} parent=59 // pred_fallthru
            _
          %v391 = vld [vmem:[%s371] sm:$0xff]
          %v392 = vld [vmem:[%s371 + $0x8] sm:$0xff]
          %v393 = vld [vmem:[%s371 + $0x10] sm:$0xff]
          %v394 = vld [vmem:[%s371 + $0x18] sm:$0xff]
          %v395 = vld [vmem:[%s371 + $0x20] sm:$0xff]
          %v396 = vld [vmem:[%s371 + $0x28] sm:$0xff]
          %v397 = vld [vmem:[%s371 + $0x30] sm:$0xff]
          %v398 = vld [vmem:[%s371 + $0x38] sm:$0xff]
          %v399 = vld [vmem:[%s371 + $0x40] sm:$0xff]
          %v400 = vld [vmem:[%s371 + $0x48] sm:$0xff]
          %v401 = vld [vmem:[%s371 + $0x50] sm:$0xff]
          %v402 = vld [vmem:[%s371 + $0x58] sm:$0xff]
          %v403 = vld [vmem:[%s371 + $0x60] sm:$0xff]
          %v404 = vld [vmem:[%s371 + $0x68] sm:$0xff]
          %v405 = vld [vmem:[%s371 + $0x70] sm:$0xff]
          %v406 = vld [vmem:[%s371 + $0x78] sm:$0xff]
          %v407 = vpack.c.bf16 %v392, %v391
          %v408 = vpack.c.bf16 %v394, %v393
          %v409 = vpack.c.bf16 %v396, %v395
          %v410 = vpack.c.bf16 %v398, %v397
          %v411 = vpack.c.bf16 %v400, %v399
          %v412 = vpack.c.bf16 %v402, %v401
          %v413 = vpack.c.bf16 %v404, %v403
          %v414 = vpack.c.bf16 %v406, %v405
          %v415 = vld [vmem:[%s1] sm:$0xff]
          %v416 = vld [vmem:[%s1 + $0x8] sm:$0xff]
          %v417 = vld [vmem:[%s1 + $0x10] sm:$0xff]
          %v418 = vld [vmem:[%s1 + $0x18] sm:$0xff]
          %v419 = vld [vmem:[%s2] sm:$0x3]
          %v421 = vperm.slane %v419, 0
          %v422 = vperm.slane %v419, 1
          %v429 = vunpack.c.l.b16 %v415
          %v430 = vunpack.c.h.b16 %v415
          %v431 = vunpack.c.l.b16 %v416
          %v432 = vunpack.c.h.b16 %v416
          %v433 = vunpack.c.l.b16 %v417
          %v434 = vunpack.c.h.b16 %v417
          %v435 = vunpack.c.l.b16 %v418
          %v436 = vunpack.c.h.b16 %v418
          %v437 = vpack.c.b16 %v431, %v429
          %v438 = vpack.c.b16 %v432, %v430
          %v439 = vpack.c.b16 %v435, %v433
          %v440 = vpack.c.b16 %v436, %v434
          %vm445 = vcmask 261120
          %v447 = vsel %vm445, %v407, 0
          %v450 = vsel %vm445, %v408, 0
          %v453 = vsel %vm445, %v409, 0
          %v456 = vsel %vm445, %v410, 0
          %v459 = vsel %vm445, %v411, 0
          %v462 = vsel %vm445, %v412, 0
          %v465 = vsel %vm445, %v413, 0
          %v468 = vsel %vm445, %v414, 0
          %470 = vmatpush.bf16.msra.mxu0 0
          %471 = vmatpush.bf16.msra.mxu0 0
          %472 = vmatpush.bf16.msra.mxu0 0
          %473 = vmatpush.bf16.msra.mxu0 0
          %474 = vmatpush.bf16.msra.mxu0 0
          %475 = vmatpush.bf16.msra.mxu0 0
          %476 = vmatpush.bf16.msra.mxu0 %v439
          %477 = vmatpush.bf16.msra.mxu0 %v437
          %478 = vmatmul.bf16.gmra.mxu0 %v447
          %v479 = vpop.f32.mrf.mxu0
          %v480 = vadd.f32 %v421, %v479
          %v481 = vpop.f32.mrf.mxu0
          %v482 = vadd.f32 %v421, %v481
          %483 = vmatmul.bf16.gmra.mxu0 %v450
          %v484 = vpop.f32.mrf.mxu0
          %v485 = vadd.f32 %v421, %v484
          %v486 = vpop.f32.mrf.mxu0
          %v487 = vadd.f32 %v421, %v486
          %488 = vmatmul.bf16.gmra.mxu0 %v453
          %v489 = vpop.f32.mrf.mxu0
          %v490 = vadd.f32 %v421, %v489
          %v491 = vpop.f32.mrf.mxu0
          %v492 = vadd.f32 %v421, %v491
          %493 = vmatmul.bf16.gmra.mxu0 %v456
          %v494 = vpop.f32.mrf.mxu0
          %v495 = vadd.f32 %v421, %v494
          %v496 = vpop.f32.mrf.mxu0
          %v497 = vadd.f32 %v421, %v496
          %498 = vmatmul.bf16.gmra.mxu0 %v459
          %v499 = vpop.f32.mrf.mxu0
          %v500 = vadd.f32 %v421, %v499
          %v501 = vpop.f32.mrf.mxu0
          %v502 = vadd.f32 %v421, %v501
          %503 = vmatmul.bf16.gmra.mxu0 %v462
          %v504 = vpop.f32.mrf.mxu0
          %v505 = vadd.f32 %v421, %v504
          %v506 = vpop.f32.mrf.mxu0
          %v507 = vadd.f32 %v421, %v506
          %508 = vmatmul.bf16.gmra.mxu0 %v465
          %v509 = vpop.f32.mrf.mxu0
          %v510 = vadd.f32 %v421, %v509
          %v511 = vpop.f32.mrf.mxu0
          %v512 = vadd.f32 %v421, %v511
          %513 = vmatmul.bf16.gmra.mxu0 %v468
          %v514 = vpop.f32.mrf.mxu0
          %v515 = vadd.f32 %v421, %v514
          %v516 = vpop.f32.mrf.mxu0
          %v517 = vadd.f32 %v421, %v516
          %518 = vdwg.mxu0
          %519 = vmatpush.bf16.msra.mxu0 0
          %520 = vmatpush.bf16.msra.mxu0 0
          %521 = vmatpush.bf16.msra.mxu0 0
          %522 = vmatpush.bf16.msra.mxu0 0
          %523 = vmatpush.bf16.msra.mxu0 0
          %524 = vmatpush.bf16.msra.mxu0 0
          %525 = vmatpush.bf16.msra.mxu0 %v440
          %526 = vmatpush.bf16.msra.mxu0 %v438
          %527 = vmatmul.bf16.gmra.mxu0 %v447
          %v528 = vpop.f32.mrf.mxu0
          %v529 = vadd.f32 %v422, %v528
          %v530 = vpop.f32.mrf.mxu0
          %v531 = vadd.f32 %v422, %v530
          %532 = vmatmul.bf16.gmra.mxu0 %v450
          %v533 = vpop.f32.mrf.mxu0
          %v534 = vadd.f32 %v422, %v533
          %v535 = vpop.f32.mrf.mxu0
          %v536 = vadd.f32 %v422, %v535
          %537 = vmatmul.bf16.gmra.mxu0 %v453
          %v538 = vpop.f32.mrf.mxu0
          %v539 = vadd.f32 %v422, %v538
          %v540 = vpop.f32.mrf.mxu0
          %v541 = vadd.f32 %v422, %v540
          %542 = vmatmul.bf16.gmra.mxu0 %v456
          %v543 = vpop.f32.mrf.mxu0
          %v544 = vadd.f32 %v422, %v543
          %v545 = vpop.f32.mrf.mxu0
          %v546 = vadd.f32 %v422, %v545
          %547 = vmatmul.bf16.gmra.mxu0 %v459
          %v548 = vpop.f32.mrf.mxu0
          %v549 = vadd.f32 %v422, %v548
          %v550 = vpop.f32.mrf.mxu0
          %v551 = vadd.f32 %v422, %v550
          %552 = vmatmul.bf16.gmra.mxu0 %v462
          %v553 = vpop.f32.mrf.mxu0
          %v554 = vadd.f32 %v422, %v553
          %v555 = vpop.f32.mrf.mxu0
          %v556 = vadd.f32 %v422, %v555
          %557 = vmatmul.bf16.gmra.mxu0 %v465
          %v558 = vpop.f32.mrf.mxu0
          %v559 = vadd.f32 %v422, %v558
          %v560 = vpop.f32.mrf.mxu0
          %v561 = vadd.f32 %v422, %v560
          %562 = vmatmul.bf16.gmra.mxu0 %v468
          %v563 = vpop.f32.mrf.mxu0
          %v564 = vadd.f32 %v422, %v563
          %v565 = vpop.f32.mrf.mxu0
          %v566 = vadd.f32 %v422, %v565
          %567 = vdwg.mxu0
          %vm568 = vcmp.gt.f32.partialorder %v480, 0.0
          %vm569 = vcmp.gt.f32.partialorder %v529, 0.0
          %vm570 = vcmp.gt.f32.partialorder %v482, 0.0
          %vm571 = vcmp.gt.f32.partialorder %v531, 0.0
          %vm572 = vcmp.gt.f32.partialorder %v485, 0.0
          %vm573 = vcmp.gt.f32.partialorder %v534, 0.0
          %vm574 = vcmp.gt.f32.partialorder %v487, 0.0
          %vm575 = vcmp.gt.f32.partialorder %v536, 0.0
          %vm576 = vcmp.gt.f32.partialorder %v490, 0.0
          %vm577 = vcmp.gt.f32.partialorder %v539, 0.0
          %vm578 = vcmp.gt.f32.partialorder %v492, 0.0
          %vm579 = vcmp.gt.f32.partialorder %v541, 0.0
          %vm580 = vcmp.gt.f32.partialorder %v495, 0.0
          %vm581 = vcmp.gt.f32.partialorder %v544, 0.0
          %vm582 = vcmp.gt.f32.partialorder %v497, 0.0
          %vm583 = vcmp.gt.f32.partialorder %v546, 0.0
          %vm584 = vcmp.gt.f32.partialorder %v500, 0.0
          %vm585 = vcmp.gt.f32.partialorder %v549, 0.0
          %vm586 = vcmp.gt.f32.partialorder %v502, 0.0
          %vm587 = vcmp.gt.f32.partialorder %v551, 0.0
          %vm588 = vcmp.gt.f32.partialorder %v505, 0.0
          %vm589 = vcmp.gt.f32.partialorder %v554, 0.0
          %vm590 = vcmp.gt.f32.partialorder %v507, 0.0
          %vm591 = vcmp.gt.f32.partialorder %v556, 0.0
          %vm592 = vcmp.gt.f32.partialorder %v510, 0.0
          %vm593 = vcmp.gt.f32.partialorder %v559, 0.0
          %vm594 = vcmp.gt.f32.partialorder %v512, 0.0
          %vm595 = vcmp.gt.f32.partialorder %v561, 0.0
          %vm596 = vcmp.gt.f32.partialorder %v515, 0.0
          %vm597 = vcmp.gt.f32.partialorder %v564, 0.0
          %vm598 = vcmp.gt.f32.partialorder %v517, 0.0
          %vm599 = vcmp.gt.f32.partialorder %v566, 0.0
          %v600 = vmul.f32 %v480, 0.2
          %v601 = vmul.f32 %v529, 0.2
          %v602 = vmul.f32 %v482, 0.2
          %v603 = vmul.f32 %v531, 0.2
          %v604 = vmul.f32 %v485, 0.2
          %v605 = vmul.f32 %v534, 0.2
          %v606 = vmul.f32 %v487, 0.2
          %v607 = vmul.f32 %v536, 0.2
          %v608 = vmul.f32 %v490, 0.2
          %v609 = vmul.f32 %v539, 0.2
          %v610 = vmul.f32 %v492, 0.2
          %v611 = vmul.f32 %v541, 0.2
          %v612 = vmul.f32 %v495, 0.2
          %v613 = vmul.f32 %v544, 0.2
          %v614 = vmul.f32 %v497, 0.2
          %v615 = vmul.f32 %v546, 0.2
          %v616 = vmul.f32 %v500, 0.2
          %v617 = vmul.f32 %v549, 0.2
          %v618 = vmul.f32 %v502, 0.2
          %v619 = vmul.f32 %v551, 0.2
          %v620 = vmul.f32 %v505, 0.2
          %v621 = vmul.f32 %v554, 0.2
          %v622 = vmul.f32 %v507, 0.2
          %v623 = vmul.f32 %v556, 0.2
          %v624 = vmul.f32 %v510, 0.2
          %v625 = vmul.f32 %v559, 0.2
          %v626 = vmul.f32 %v512, 0.2
          %v627 = vmul.f32 %v561, 0.2
          %v628 = vmul.f32 %v515, 0.2
          %v629 = vmul.f32 %v564, 0.2
          %v630 = vmul.f32 %v517, 0.2
          %v631 = vmul.f32 %v566, 0.2
          %v632 = vsel %vm568, %v480, %v600
          %v633 = vsel %vm569, %v529, %v601
          %v634 = vsel %vm570, %v482, %v602
          %v635 = vsel %vm571, %v531, %v603
          %v636 = vsel %vm572, %v485, %v604
          %v637 = vsel %vm573, %v534, %v605
          %v638 = vsel %vm574, %v487, %v606
          %v639 = vsel %vm575, %v536, %v607
          %v640 = vsel %vm576, %v490, %v608
          %v641 = vsel %vm577, %v539, %v609
          %v642 = vsel %vm578, %v492, %v610
          %v643 = vsel %vm579, %v541, %v611
          %v644 = vsel %vm580, %v495, %v612
          %v645 = vsel %vm581, %v544, %v613
          %v646 = vsel %vm582, %v497, %v614
          %v647 = vsel %vm583, %v546, %v615
          %v648 = vsel %vm584, %v500, %v616
          %v649 = vsel %vm585, %v549, %v617
          %v650 = vsel %vm586, %v502, %v618
          %v651 = vsel %vm587, %v551, %v619
          %v652 = vsel %vm588, %v505, %v620
          %v653 = vsel %vm589, %v554, %v621
          %v654 = vsel %vm590, %v507, %v622
          %v655 = vsel %vm591, %v556, %v623
          %v656 = vsel %vm592, %v510, %v624
          %v657 = vsel %vm593, %v559, %v625
          %v658 = vsel %vm594, %v512, %v626
          %v659 = vsel %vm595, %v561, %v627
          %v660 = vsel %vm596, %v515, %v628
          %v661 = vsel %vm597, %v564, %v629
          %v662 = vsel %vm598, %v517, %v630
          %v663 = vsel %vm599, %v566, %v631
          %v664 = vpack.c.bf16 %v634, %v632
          %v665 = vpack.c.bf16 %v635, %v633
          %v666 = vpack.c.bf16 %v638, %v636
          %v667 = vpack.c.bf16 %v639, %v637
          %v668 = vpack.c.bf16 %v642, %v640
          %v669 = vpack.c.bf16 %v643, %v641
          %v670 = vpack.c.bf16 %v646, %v644
          %v671 = vpack.c.bf16 %v647, %v645
          %v672 = vpack.c.bf16 %v650, %v648
          %v673 = vpack.c.bf16 %v651, %v649
          %v674 = vpack.c.bf16 %v654, %v652
          %v675 = vpack.c.bf16 %v655, %v653
          %v676 = vpack.c.bf16 %v658, %v656
          %v677 = vpack.c.bf16 %v659, %v657
          %v678 = vpack.c.bf16 %v662, %v660
          %v679 = vpack.c.bf16 %v663, %v661
          %v680 = vld [vmem:[%s3] sm:$0xf]
          %v681 = vld [vmem:[%s3 + $0x4] sm:$0xf]
          %v682 = vld [vmem:[%s3 + $0x8] sm:$0xf]
          %v683 = vld [vmem:[%s3 + $0xc] sm:$0xf]
          %v684 = vld [vmem:[%s3 + $0x10] sm:$0xf]
          %v685 = vld [vmem:[%s3 + $0x14] sm:$0xf]
          %v686 = vld [vmem:[%s3 + $0x18] sm:$0xf]
          %v687 = vld [vmem:[%s3 + $0x1c] sm:$0xf]
          %v688 = vld [vmem:[%s3 + $0x20] sm:$0xf]
          %v689 = vld [vmem:[%s3 + $0x24] sm:$0xf]
          %v690 = vld [vmem:[%s3 + $0x28] sm:$0xf]
          %v691 = vld [vmem:[%s3 + $0x2c] sm:$0xf]
          %v692 = vld [vmem:[%s3 + $0x30] sm:$0xf]
          %v693 = vld [vmem:[%s3 + $0x34] sm:$0xf]
          %v694 = vld [vmem:[%s3 + $0x38] sm:$0xf]
          %v695 = vld [vmem:[%s3 + $0x3c] sm:$0xf]
          %v696 = vld [vmem:[%s3 + $0x40] sm:$0xf]
          %v697 = vld [vmem:[%s3 + $0x44] sm:$0xf]
          %v698 = vld [vmem:[%s3 + $0x48] sm:$0xf]
          %v699 = vld [vmem:[%s3 + $0x4c] sm:$0xf]
          %v700 = vld [vmem:[%s3 + $0x50] sm:$0xf]
          %v701 = vld [vmem:[%s3 + $0x54] sm:$0xf]
          %v702 = vld [vmem:[%s3 + $0x58] sm:$0xf]
          %v703 = vld [vmem:[%s3 + $0x5c] sm:$0xf]
          %v704 = vld [vmem:[%s3 + $0x60] sm:$0xf]
          %v705 = vld [vmem:[%s3 + $0x64] sm:$0xf]
          %v706 = vld [vmem:[%s3 + $0x68] sm:$0xf]
          %v707 = vld [vmem:[%s3 + $0x6c] sm:$0xf]
          %v708 = vld [vmem:[%s3 + $0x70] sm:$0xf]
          %v709 = vld [vmem:[%s3 + $0x74] sm:$0xf]
          %v710 = vld [vmem:[%s3 + $0x78] sm:$0xf]
          %v711 = vld [vmem:[%s3 + $0x7c] sm:$0xf]
          %v712 = vld [vmem:[%s4] sm:$0x1]
          %v714 = vperm.slane %v712, 0
          %v748 = vunpack.c.l.b16 %v680
          %v749 = vunpack.c.l.b16 %v681
          %v750 = vunpack.c.l.b16 %v682
          %v751 = vunpack.c.l.b16 %v683
          %v752 = vunpack.c.l.b16 %v684
          %v753 = vunpack.c.l.b16 %v685
          %v754 = vunpack.c.l.b16 %v686
          %v755 = vunpack.c.l.b16 %v687
          %v756 = vunpack.c.l.b16 %v688
          %v757 = vunpack.c.l.b16 %v689
          %v758 = vunpack.c.l.b16 %v690
          %v759 = vunpack.c.l.b16 %v691
          %v760 = vunpack.c.l.b16 %v692
          %v761 = vunpack.c.l.b16 %v693
          %v762 = vunpack.c.l.b16 %v694
          %v763 = vunpack.c.l.b16 %v695
          %v764 = vunpack.c.l.b16 %v696
          %v765 = vunpack.c.l.b16 %v697
          %v766 = vunpack.c.l.b16 %v698
          %v767 = vunpack.c.l.b16 %v699
          %v768 = vunpack.c.l.b16 %v700
          %v769 = vunpack.c.l.b16 %v701
          %v770 = vunpack.c.l.b16 %v702
          %v771 = vunpack.c.l.b16 %v703
          %v772 = vunpack.c.l.b16 %v704
          %v773 = vunpack.c.l.b16 %v705
          %v774 = vunpack.c.l.b16 %v706
          %v775 = vunpack.c.l.b16 %v707
          %v776 = vunpack.c.l.b16 %v708
          %v777 = vunpack.c.l.b16 %v709
          %v778 = vunpack.c.l.b16 %v710
          %v779 = vunpack.c.l.b16 %v711
          %v780 = vpack.c.b16 %v749, %v748
          %v781 = vpack.c.b16 %v751, %v750
          %v782 = vpack.c.b16 %v753, %v752
          %v783 = vpack.c.b16 %v755, %v754
          %v784 = vpack.c.b16 %v757, %v756
          %v785 = vpack.c.b16 %v759, %v758
          %v786 = vpack.c.b16 %v761, %v760
          %v787 = vpack.c.b16 %v763, %v762
          %v788 = vpack.c.b16 %v765, %v764
          %v789 = vpack.c.b16 %v767, %v766
          %v790 = vpack.c.b16 %v769, %v768
          %v791 = vpack.c.b16 %v771, %v770
          %v792 = vpack.c.b16 %v773, %v772
          %v793 = vpack.c.b16 %v775, %v774
          %v794 = vpack.c.b16 %v777, %v776
          %v795 = vpack.c.b16 %v779, %v778
          %812 = vmatpush.bf16.msra.mxu0 %v787
          %813 = vmatpush.bf16.msra.mxu0 %v786
          %814 = vmatpush.bf16.msra.mxu0 %v785
          %815 = vmatpush.bf16.msra.mxu0 %v784
          %816 = vmatpush.bf16.msra.mxu0 %v783
          %817 = vmatpush.bf16.msra.mxu0 %v782
          %818 = vmatpush.bf16.msra.mxu0 %v781
          %819 = vmatpush.bf16.msra.mxu0 %v780
          %820 = vmatmul.bf16.gmra.mxu0 %v664
          %v821 = vpop.f32.mrf.mxu0
          %v822 = vadd.f32 %v714, %v821
          %v823 = vpop.f32.mrf.mxu0
          %v824 = vadd.f32 %v714, %v823
          %825 = vmatmul.bf16.gmra.mxu0 %v666
          %v826 = vpop.f32.mrf.mxu0
          %v827 = vadd.f32 %v714, %v826
          %v828 = vpop.f32.mrf.mxu0
          %v829 = vadd.f32 %v714, %v828
          %830 = vmatmul.bf16.gmra.mxu0 %v668
          %v831 = vpop.f32.mrf.mxu0
          %v832 = vadd.f32 %v714, %v831
          %v833 = vpop.f32.mrf.mxu0
          %v834 = vadd.f32 %v714, %v833
          %835 = vmatmul.bf16.gmra.mxu0 %v670
          %v836 = vpop.f32.mrf.mxu0
          %v837 = vadd.f32 %v714, %v836
          %v838 = vpop.f32.mrf.mxu0
          %v839 = vadd.f32 %v714, %v838
          %840 = vmatmul.bf16.gmra.mxu0 %v672
          %v841 = vpop.f32.mrf.mxu0
          %v842 = vadd.f32 %v714, %v841
          %v843 = vpop.f32.mrf.mxu0
          %v844 = vadd.f32 %v714, %v843
          %845 = vmatmul.bf16.gmra.mxu0 %v674
          %v846 = vpop.f32.mrf.mxu0
          %v847 = vadd.f32 %v714, %v846
          %v848 = vpop.f32.mrf.mxu0
          %v849 = vadd.f32 %v714, %v848
          %850 = vmatmul.bf16.gmra.mxu0 %v676
          %v851 = vpop.f32.mrf.mxu0
          %v852 = vadd.f32 %v714, %v851
          %v853 = vpop.f32.mrf.mxu0
          %v854 = vadd.f32 %v714, %v853
          %855 = vmatmul.bf16.gmra.mxu0 %v678
          %v856 = vpop.f32.mrf.mxu0
          %v857 = vadd.f32 %v714, %v856
          %v858 = vpop.f32.mrf.mxu0
          %v859 = vadd.f32 %v714, %v858
          %860 = vdwg.mxu0
          %861 = vmatpush.bf16.msra.mxu0 %v795
          %862 = vmatpush.bf16.msra.mxu0 %v794
          %863 = vmatpush.bf16.msra.mxu0 %v793
          %864 = vmatpush.bf16.msra.mxu0 %v792
          %865 = vmatpush.bf16.msra.mxu0 %v791
          %866 = vmatpush.bf16.msra.mxu0 %v790
          %867 = vmatpush.bf16.msra.mxu0 %v789
          %868 = vmatpush.bf16.msra.mxu0 %v788
          %869 = vmatmul.bf16.gmra.mxu0 %v665
          %v870 = vpop.f32.mrf.mxu0
          %v871 = vadd.f32 %v822, %v870
          %v872 = vpop.f32.mrf.mxu0
          %v873 = vadd.f32 %v824, %v872
          %874 = vmatmul.bf16.gmra.mxu0 %v667
          %v875 = vpop.f32.mrf.mxu0
          %v876 = vadd.f32 %v827, %v875
          %v877 = vpop.f32.mrf.mxu0
          %v878 = vadd.f32 %v829, %v877
          %879 = vmatmul.bf16.gmra.mxu0 %v669
          %v880 = vpop.f32.mrf.mxu0
          %v881 = vadd.f32 %v832, %v880
          %v882 = vpop.f32.mrf.mxu0
          %v883 = vadd.f32 %v834, %v882
          %884 = vmatmul.bf16.gmra.mxu0 %v671
          %v885 = vpop.f32.mrf.mxu0
          %v886 = vadd.f32 %v837, %v885
          %v887 = vpop.f32.mrf.mxu0
          %v888 = vadd.f32 %v839, %v887
          %889 = vmatmul.bf16.gmra.mxu0 %v673
          %v890 = vpop.f32.mrf.mxu0
          %v891 = vadd.f32 %v842, %v890
          %v892 = vpop.f32.mrf.mxu0
          %v893 = vadd.f32 %v844, %v892
          %894 = vmatmul.bf16.gmra.mxu0 %v675
          %v895 = vpop.f32.mrf.mxu0
          %v896 = vadd.f32 %v847, %v895
          %v897 = vpop.f32.mrf.mxu0
          %v898 = vadd.f32 %v849, %v897
          %899 = vmatmul.bf16.gmra.mxu0 %v677
          %v900 = vpop.f32.mrf.mxu0
          %v901 = vadd.f32 %v852, %v900
          %v902 = vpop.f32.mrf.mxu0
          %v903 = vadd.f32 %v854, %v902
          %904 = vmatmul.bf16.gmra.mxu0 %v679
          %v905 = vpop.f32.mrf.mxu0
          %v906 = vadd.f32 %v857, %v905
          %v907 = vpop.f32.mrf.mxu0
          %v908 = vadd.f32 %v859, %v907
          %909 = vdwg.mxu0
          %s910 = scalar_lea.vmem [#allocation2], %s380
          %911 = vst [vmem:[%s910] sm:$0xff] %v871
          %912 = vst [vmem:[%s910 + $0x8] sm:$0xff] %v873
          %913 = vst [vmem:[%s910 + $0x10] sm:$0xff] %v876
          %914 = vst [vmem:[%s910 + $0x18] sm:$0xff] %v878
          %915 = vst [vmem:[%s910 + $0x20] sm:$0xff] %v881
          %916 = vst [vmem:[%s910 + $0x28] sm:$0xff] %v883
          %917 = vst [vmem:[%s910 + $0x30] sm:$0xff] %v886
          %918 = vst [vmem:[%s910 + $0x38] sm:$0xff] %v888
          %919 = vst [vmem:[%s910 + $0x40] sm:$0xff] %v891
          %920 = vst [vmem:[%s910 + $0x48] sm:$0xff] %v893
          %921 = vst [vmem:[%s910 + $0x50] sm:$0xff] %v896
          %922 = vst [vmem:[%s910 + $0x58] sm:$0xff] %v898
          %923 = vst [vmem:[%s910 + $0x60] sm:$0xff] %v901
          %924 = vst [vmem:[%s910 + $0x68] sm:$0xff] %v903
          %925 = vst [vmem:[%s910 + $0x70] sm:$0xff] %v906
          %926 = vst [vmem:[%s910 + $0x78] sm:$0xff] %v908
          %p927 = scmp.eq.s32.totalorder %s29, 1
          // Predicated region
          $region65: #{tpu_custom_call.1} parent=59 // pred_check
            %p928 = pneg %p927
          $region66: #{tpu_custom_call.1} parent=59 // pred_check_branch
            %930 = sbr.rel (%p928) target = $region68
          $region67: #{tpu_custom_call.1} parent=59 // pred_region
            %v931 = vlaneseq
            %v932 = vshrl.u32 %v931, 7
            %v933 = vadd.s32 %v932, 8
            %v934 = vadd.s32 %v932, 16
            %v935 = vadd.s32 %v932, 24
            %v936 = vadd.s32 %v932, 32
            %v937 = vadd.s32 %v932, 40
            %v938 = vadd.s32 %v932, 48
            %v939 = vadd.s32 %v932, 56
            %v940 = vadd.s32 %v932, 64
            %v941 = vadd.s32 %v932, 72
            %v942 = vadd.s32 %v932, 80
            %v943 = vadd.s32 %v932, 88
            %v944 = vadd.s32 %v932, 96
            %v945 = vadd.s32 %v932, 104
            %v946 = vadd.s32 %v932, 112
            %v947 = vadd.s32 %v932, 120
            %v948 = vstv %s380
            %v949 = vadd.s32 %v948, %v932
            %v950 = vadd.s32 %v948, %v933
            %v951 = vadd.s32 %v948, %v934
            %v952 = vadd.s32 %v948, %v935
            %v953 = vadd.s32 %v948, %v936
            %v954 = vadd.s32 %v948, %v937
            %v955 = vadd.s32 %v948, %v938
            %v956 = vadd.s32 %v948, %v939
            %v957 = vadd.s32 %v948, %v940
            %v958 = vadd.s32 %v948, %v941
            %v959 = vadd.s32 %v948, %v942
            %v960 = vadd.s32 %v948, %v943
            %v961 = vadd.s32 %v948, %v944
            %v962 = vadd.s32 %v948, %v945
            %v963 = vadd.s32 %v948, %v946
            %v964 = vadd.s32 %v948, %v947
            %vm965 = vcmp.lt.s32.totalorder %v949, 200
            %vm966 = vcmp.lt.s32.totalorder %v950, 200
            %vm967 = vcmp.lt.s32.totalorder %v951, 200
            %vm968 = vcmp.lt.s32.totalorder %v952, 200
            %vm969 = vcmp.lt.s32.totalorder %v953, 200
            %vm970 = vcmp.lt.s32.totalorder %v954, 200
            %vm971 = vcmp.lt.s32.totalorder %v955, 200
            %vm972 = vcmp.lt.s32.totalorder %v956, 200
            %vm973 = vcmp.lt.s32.totalorder %v957, 200
            %vm974 = vcmp.lt.s32.totalorder %v958, 200
            %vm975 = vcmp.lt.s32.totalorder %v959, 200
            %vm976 = vcmp.lt.s32.totalorder %v960, 200
            %vm977 = vcmp.lt.s32.totalorder %v961, 200
            %vm978 = vcmp.lt.s32.totalorder %v962, 200
            %vm979 = vcmp.lt.s32.totalorder %v963, 200
            %vm980 = vcmp.lt.s32.totalorder %v964, 200
            %v981 = vsel %vm965, 1, 0
            %v982 = vsel %vm966, 1, 0
            %v983 = vsel %vm967, 1, 0
            %v984 = vsel %vm968, 1, 0
            %v985 = vsel %vm969, 1, 0
            %v986 = vsel %vm970, 1, 0
            %v987 = vsel %vm971, 1, 0
            %v988 = vsel %vm972, 1, 0
            %v989 = vsel %vm973, 1, 0
            %v990 = vsel %vm974, 1, 0
            %v991 = vsel %vm975, 1, 0
            %v992 = vsel %vm976, 1, 0
            %v993 = vsel %vm977, 1, 0
            %v994 = vsel %vm978, 1, 0
            %v995 = vsel %vm979, 1, 0
            %v996 = vsel %vm980, 1, 0
            %vm997 = vcmp.eq.s32.totalorder %v981, 1
            %vm998 = vcmp.eq.s32.totalorder %v982, 1
            %vm999 = vcmp.eq.s32.totalorder %v983, 1
            %vm1000 = vcmp.eq.s32.totalorder %v984, 1
            %vm1001 = vcmp.eq.s32.totalorder %v985, 1
            %vm1002 = vcmp.eq.s32.totalorder %v986, 1
            %vm1003 = vcmp.eq.s32.totalorder %v987, 1
            %vm1004 = vcmp.eq.s32.totalorder %v988, 1
            %vm1005 = vcmp.eq.s32.totalorder %v989, 1
            %vm1006 = vcmp.eq.s32.totalorder %v990, 1
            %vm1007 = vcmp.eq.s32.totalorder %v991, 1
            %vm1008 = vcmp.eq.s32.totalorder %v992, 1
            %vm1009 = vcmp.eq.s32.totalorder %v993, 1
            %vm1010 = vcmp.eq.s32.totalorder %v994, 1
            %vm1011 = vcmp.eq.s32.totalorder %v995, 1
            %vm1012 = vcmp.eq.s32.totalorder %v996, 1
            %v1013 = vsel %vm997, %v871, 0.0
            %v1014 = vsel %vm998, %v873, 0.0
            %v1015 = vsel %vm999, %v876, 0.0
            %v1016 = vsel %vm1000, %v878, 0.0
            %v1017 = vsel %vm1001, %v881, 0.0
            %v1018 = vsel %vm1002, %v883, 0.0
            %v1019 = vsel %vm1003, %v886, 0.0
            %v1020 = vsel %vm1004, %v888, 0.0
            %v1021 = vsel %vm1005, %v891, 0.0
            %v1022 = vsel %vm1006, %v893, 0.0
            %v1023 = vsel %vm1007, %v896, 0.0
            %v1024 = vsel %vm1008, %v898, 0.0
            %v1025 = vsel %vm1009, %v901, 0.0
            %v1026 = vsel %vm1010, %v903, 0.0
            %v1027 = vsel %vm1011, %v906, 0.0
            %v1028 = vsel %vm1012, %v908, 0.0
            %v1029 = vld [vmem:[#allocation3] sm:$0x1]
            %v1030 = vadd.f32 %v1013, %v1014
            %v1031 = vadd.f32 %v1030, %v1015
            %v1032 = vadd.f32 %v1031, %v1016
            %v1033 = vadd.f32 %v1032, %v1017
            %v1034 = vadd.f32 %v1033, %v1018
            %v1035 = vadd.f32 %v1034, %v1019
            %v1036 = vadd.f32 %v1035, %v1020
            %v1037 = vadd.f32 %v1036, %v1021
            %v1038 = vadd.f32 %v1037, %v1022
            %v1039 = vadd.f32 %v1038, %v1023
            %v1040 = vadd.f32 %v1039, %v1024
            %v1041 = vadd.f32 %v1040, %v1025
            %v1042 = vadd.f32 %v1041, %v1026
            %v1043 = vadd.f32 %v1042, %v1027
            %v1044 = vadd.f32 %v1043, %v1028
            %v1045 = vrot.slane %v1044, 4
            %v1046 = vadd.f32 %v1044, %v1045
            %v1047 = vrot.slane %v1046, 2
            %v1048 = vadd.f32 %v1046, %v1047
            %v1049 = vrot.slane %v1048, 1
            %v1050 = vadd.f32 %v1048, %v1049
            %v1051 = vadd.f32 %v1029, %v1050
            %1052 = vst [vmem:[#allocation3] sm:$0x1] %v1051
            %v1053 = vld [vmem:[#allocation4] sm:$0x1]
            %v1054 = vmul.f32 %v1013, %v1013
            %v1055 = vmul.f32 %v1014, %v1014
            %v1056 = vmul.f32 %v1015, %v1015
            %v1057 = vmul.f32 %v1016, %v1016
            %v1058 = vmul.f32 %v1017, %v1017
            %v1059 = vmul.f32 %v1018, %v1018
            %v1060 = vmul.f32 %v1019, %v1019
            %v1061 = vmul.f32 %v1020, %v1020
            %v1062 = vmul.f32 %v1021, %v1021
            %v1063 = vmul.f32 %v1022, %v1022
            %v1064 = vmul.f32 %v1023, %v1023
            %v1065 = vmul.f32 %v1024, %v1024
            %v1066 = vmul.f32 %v1025, %v1025
            %v1067 = vmul.f32 %v1026, %v1026
            %v1068 = vmul.f32 %v1027, %v1027
            %v1069 = vmul.f32 %v1028, %v1028
            %v1070 = vadd.f32 %v1054, %v1055
            %v1071 = vadd.f32 %v1070, %v1056
            %v1072 = vadd.f32 %v1071, %v1057
            %v1073 = vadd.f32 %v1072, %v1058
            %v1074 = vadd.f32 %v1073, %v1059
            %v1075 = vadd.f32 %v1074, %v1060
            %v1076 = vadd.f32 %v1075, %v1061
            %v1077 = vadd.f32 %v1076, %v1062
            %v1078 = vadd.f32 %v1077, %v1063
            %v1079 = vadd.f32 %v1078, %v1064
            %v1080 = vadd.f32 %v1079, %v1065
            %v1081 = vadd.f32 %v1080, %v1066
            %v1082 = vadd.f32 %v1081, %v1067
            %v1083 = vadd.f32 %v1082, %v1068
            %v1084 = vadd.f32 %v1083, %v1069
            %v1085 = vrot.slane %v1084, 4
            %v1086 = vadd.f32 %v1084, %v1085
            %v1087 = vrot.slane %v1086, 2
            %v1088 = vadd.f32 %v1086, %v1087
            %v1089 = vrot.slane %v1088, 1
            %v1090 = vadd.f32 %v1088, %v1089
            %v1091 = vadd.f32 %v1053, %v1090
            %1092 = vst [vmem:[#allocation4] sm:$0x1] %v1091
          $region68: #{tpu_custom_call.1} parent=59 // pred_fallthru
            _
          %p1093 = scmp.ne.s32.totalorder %s29, 1
          // Predicated region
          $region69: #{tpu_custom_call.1} parent=59 // pred_check
            %p1094 = pneg %p1093
          $region70: #{tpu_custom_call.1} parent=59 // pred_check_branch
            %1096 = sbr.rel (%p1094) target = $region72
          $region71: #{tpu_custom_call.1} parent=59 // pred_region
            %v1097 = vld [vmem:[#allocation3] sm:$0x1]
            %v1098 = vadd.f32 %v871, %v873
            %v1099 = vadd.f32 %v1098, %v876
            %v1100 = vadd.f32 %v1099, %v878
            %v1101 = vadd.f32 %v1100, %v881
            %v1102 = vadd.f32 %v1101, %v883
            %v1103 = vadd.f32 %v1102, %v886
            %v1104 = vadd.f32 %v1103, %v888
            %v1105 = vadd.f32 %v1104, %v891
            %v1106 = vadd.f32 %v1105, %v893
            %v1107 = vadd.f32 %v1106, %v896
            %v1108 = vadd.f32 %v1107, %v898
            %v1109 = vadd.f32 %v1108, %v901
            %v1110 = vadd.f32 %v1109, %v903
            %v1111 = vadd.f32 %v1110, %v906
            %v1112 = vadd.f32 %v1111, %v908
            %v1113 = vrot.slane %v1112, 4
            %v1114 = vadd.f32 %v1112, %v1113
            %v1115 = vrot.slane %v1114, 2
            %v1116 = vadd.f32 %v1114, %v1115
            %v1117 = vrot.slane %v1116, 1
            %v1118 = vadd.f32 %v1116, %v1117
            %v1119 = vadd.f32 %v1097, %v1118
            %1120 = vst [vmem:[#allocation3] sm:$0x1] %v1119
            %v1121 = vld [vmem:[#allocation4] sm:$0x1]
            %v1122 = vmul.f32 %v871, %v871
            %v1123 = vmul.f32 %v873, %v873
            %v1124 = vmul.f32 %v876, %v876
            %v1125 = vmul.f32 %v878, %v878
            %v1126 = vmul.f32 %v881, %v881
            %v1127 = vmul.f32 %v883, %v883
            %v1128 = vmul.f32 %v886, %v886
            %v1129 = vmul.f32 %v888, %v888
            %v1130 = vmul.f32 %v891, %v891
            %v1131 = vmul.f32 %v893, %v893
            %v1132 = vmul.f32 %v896, %v896
            %v1133 = vmul.f32 %v898, %v898
            %v1134 = vmul.f32 %v901, %v901
            %v1135 = vmul.f32 %v903, %v903
            %v1136 = vmul.f32 %v906, %v906
            %v1137 = vmul.f32 %v908, %v908
            %v1138 = vadd.f32 %v1122, %v1123
            %v1139 = vadd.f32 %v1138, %v1124
            %v1140 = vadd.f32 %v1139, %v1125
            %v1141 = vadd.f32 %v1140, %v1126
            %v1142 = vadd.f32 %v1141, %v1127
            %v1143 = vadd.f32 %v1142, %v1128
            %v1144 = vadd.f32 %v1143, %v1129
            %v1145 = vadd.f32 %v1144, %v1130
            %v1146 = vadd.f32 %v1145, %v1131
            %v1147 = vadd.f32 %v1146, %v1132
            %v1148 = vadd.f32 %v1147, %v1133
            %v1149 = vadd.f32 %v1148, %v1134
            %v1150 = vadd.f32 %v1149, %v1135
            %v1151 = vadd.f32 %v1150, %v1136
            %v1152 = vadd.f32 %v1151, %v1137
            %v1153 = vrot.slane %v1152, 4
            %v1154 = vadd.f32 %v1152, %v1153
            %v1155 = vrot.slane %v1154, 2
            %v1156 = vadd.f32 %v1154, %v1155
            %v1157 = vrot.slane %v1156, 1
            %v1158 = vadd.f32 %v1156, %v1157
            %v1159 = vadd.f32 %v1121, %v1158
            %1160 = vst [vmem:[#allocation4] sm:$0x1] %v1159
          $region72: #{tpu_custom_call.1} parent=59 // pred_fallthru
            _
        $region60: #{tpu_custom_call.1} parent=55 // pred_fallthru
          _
        %p1161 = scmp.eq.s32.totalorder %s28, 1
        // Predicated region
        $region73: #{tpu_custom_call.1} parent=55 // pred_check
          %p1162 = pneg %p1161
        $region74: #{tpu_custom_call.1} parent=55 // pred_check_branch
          %1164 = sbr.rel (%p1162) target = $region76
        $region75: #{tpu_custom_call.1} parent=55 // pred_region
          %p1165 = scmp.eq.s32.totalorder %s29, 0
          // Predicated region
          $region77: #{tpu_custom_call.1} parent=75 // pred_check
            %p1166 = pneg %p1165
          $region78: #{tpu_custom_call.1} parent=75 // pred_check_branch
            %1168 = sbr.rel (%p1166) target = $region80
          $region79: #{tpu_custom_call.1} parent=75 // pred_region
            %v1169 = vld [vmem:[#allocation3] sm:$0x1]
            %v1170 = vmul.f32 %v1169, 0.005
            %v1171 = vld [vmem:[#allocation4] sm:$0x1]
            %v1172 = vmul.f32 %v1171, 0.005
            %v1173 = vmul.f32 %v1170, %v1170
            %v1174 = vsub.f32 %v1172, %v1173
            %v1175 = vmax.f32 %v1174, 0.0
            %v1176 = vld [vmem:[%s5] sm:$0x1]
            %v1177 = vadd.f32 %v1175, 1e-05
            %v1178 = vrsqrt.pop %v1177
            %v1179 = vmul.f32 %v1178, %v1177
            %v1180 = vmul.f32 %v1179, %v1178
            %v1181 = vmul.f32 0.5, %v1180
            %v1182 = vsub.f32 1.5, %v1181
            %v1183 = vmul.f32 %v1178, %v1182
            %vm1184 = vweird.f32 %v1177
            %vm1185 = vweird.f32 %v1178
            %vm1186 = vmor %vm1184, %vm1185
            %v1187 = vsel %vm1186, %v1178, %v1183
            %v1188 = vmul.f32 %v1176, %v1187
            %1189 = vst [vmem:[#allocation5] sm:$0x1] %v1188
            %v1190 = vld [vmem:[%s6] sm:$0x1]
            %v1191 = vmul.f32 %v1170, %v1188
            %v1192 = vsub.f32 %v1190, %v1191
            %1193 = vst [vmem:[#allocation6] sm:$0x1] %v1192
          $region80: #{tpu_custom_call.1} parent=75 // pred_fallthru
            _
          %s1194 = scalar_lea.vmem [#allocation2], %s380
          %v1195 = vld [vmem:[%s1194] sm:$0xff]
          %v1196 = vld [vmem:[%s1194 + $0x8] sm:$0xff]
          %v1197 = vld [vmem:[%s1194 + $0x10] sm:$0xff]
          %v1198 = vld [vmem:[%s1194 + $0x18] sm:$0xff]
          %v1199 = vld [vmem:[%s1194 + $0x20] sm:$0xff]
          %v1200 = vld [vmem:[%s1194 + $0x28] sm:$0xff]
          %v1201 = vld [vmem:[%s1194 + $0x30] sm:$0xff]
          %v1202 = vld [vmem:[%s1194 + $0x38] sm:$0xff]
          %v1203 = vld [vmem:[%s1194 + $0x40] sm:$0xff]
          %v1204 = vld [vmem:[%s1194 + $0x48] sm:$0xff]
          %v1205 = vld [vmem:[%s1194 + $0x50] sm:$0xff]
          %v1206 = vld [vmem:[%s1194 + $0x58] sm:$0xff]
          %v1207 = vld [vmem:[%s1194 + $0x60] sm:$0xff]
          %v1208 = vld [vmem:[%s1194 + $0x68] sm:$0xff]
          %v1209 = vld [vmem:[%s1194 + $0x70] sm:$0xff]
          %v1210 = vld [vmem:[%s1194 + $0x78] sm:$0xff]
          %v1211 = vld [vmem:[#allocation5] sm:$0x1]
          %v1213 = vperm.slane %v1211, 0
          %v1215 = vmul.f32 %v1195, %v1213
          %v1216 = vmul.f32 %v1196, %v1213
          %v1217 = vmul.f32 %v1197, %v1213
          %v1218 = vmul.f32 %v1198, %v1213
          %v1219 = vmul.f32 %v1199, %v1213
          %v1220 = vmul.f32 %v1200, %v1213
          %v1221 = vmul.f32 %v1201, %v1213
          %v1222 = vmul.f32 %v1202, %v1213
          %v1223 = vmul.f32 %v1203, %v1213
          %v1224 = vmul.f32 %v1204, %v1213
          %v1225 = vmul.f32 %v1205, %v1213
          %v1226 = vmul.f32 %v1206, %v1213
          %v1227 = vmul.f32 %v1207, %v1213
          %v1228 = vmul.f32 %v1208, %v1213
          %v1229 = vmul.f32 %v1209, %v1213
          %v1230 = vmul.f32 %v1210, %v1213
          %v1231 = vld [vmem:[#allocation6] sm:$0x1]
          %v1233 = vperm.slane %v1231, 0
          %v1235 = vadd.f32 %v1215, %v1233
          %v1236 = vadd.f32 %v1216, %v1233
          %v1237 = vadd.f32 %v1217, %v1233
          %v1238 = vadd.f32 %v1218, %v1233
          %v1239 = vadd.f32 %v1219, %v1233
          %v1240 = vadd.f32 %v1220, %v1233
          %v1241 = vadd.f32 %v1221, %v1233
          %v1242 = vadd.f32 %v1222, %v1233
          %v1243 = vadd.f32 %v1223, %v1233
          %v1244 = vadd.f32 %v1224, %v1233
          %v1245 = vadd.f32 %v1225, %v1233
          %v1246 = vadd.f32 %v1226, %v1233
          %v1247 = vadd.f32 %v1227, %v1233
          %v1248 = vadd.f32 %v1228, %v1233
          %v1249 = vadd.f32 %v1229, %v1233
          %v1250 = vadd.f32 %v1230, %v1233
          %vm1251 = vcmp.gt.f32.partialorder %v1235, 0.0
          %vm1252 = vcmp.gt.f32.partialorder %v1236, 0.0
          %vm1253 = vcmp.gt.f32.partialorder %v1237, 0.0
          %vm1254 = vcmp.gt.f32.partialorder %v1238, 0.0
          %vm1255 = vcmp.gt.f32.partialorder %v1239, 0.0
          %vm1256 = vcmp.gt.f32.partialorder %v1240, 0.0
          %vm1257 = vcmp.gt.f32.partialorder %v1241, 0.0
          %vm1258 = vcmp.gt.f32.partialorder %v1242, 0.0
          %vm1259 = vcmp.gt.f32.partialorder %v1243, 0.0
          %vm1260 = vcmp.gt.f32.partialorder %v1244, 0.0
          %vm1261 = vcmp.gt.f32.partialorder %v1245, 0.0
          %vm1262 = vcmp.gt.f32.partialorder %v1246, 0.0
          %vm1263 = vcmp.gt.f32.partialorder %v1247, 0.0
          %vm1264 = vcmp.gt.f32.partialorder %v1248, 0.0
          %vm1265 = vcmp.gt.f32.partialorder %v1249, 0.0
          %vm1266 = vcmp.gt.f32.partialorder %v1250, 0.0
          %v1267 = vmul.f32 %v1235, 0.2
          %v1268 = vmul.f32 %v1236, 0.2
          %v1269 = vmul.f32 %v1237, 0.2
          %v1270 = vmul.f32 %v1238, 0.2
          %v1271 = vmul.f32 %v1239, 0.2
          %v1272 = vmul.f32 %v1240, 0.2
          %v1273 = vmul.f32 %v1241, 0.2
          %v1274 = vmul.f32 %v1242, 0.2
          %v1275 = vmul.f32 %v1243, 0.2
          %v1276 = vmul.f32 %v1244, 0.2
          %v1277 = vmul.f32 %v1245, 0.2
          %v1278 = vmul.f32 %v1246, 0.2
          %v1279 = vmul.f32 %v1247, 0.2
          %v1280 = vmul.f32 %v1248, 0.2
          %v1281 = vmul.f32 %v1249, 0.2
          %v1282 = vmul.f32 %v1250, 0.2
          %v1283 = vsel %vm1251, %v1235, %v1267
          %v1284 = vsel %vm1252, %v1236, %v1268
          %v1285 = vsel %vm1253, %v1237, %v1269
          %v1286 = vsel %vm1254, %v1238, %v1270
          %v1287 = vsel %vm1255, %v1239, %v1271
          %v1288 = vsel %vm1256, %v1240, %v1272
          %v1289 = vsel %vm1257, %v1241, %v1273
          %v1290 = vsel %vm1258, %v1242, %v1274
          %v1291 = vsel %vm1259, %v1243, %v1275
          %v1292 = vsel %vm1260, %v1244, %v1276
          %v1293 = vsel %vm1261, %v1245, %v1277
          %v1294 = vsel %vm1262, %v1246, %v1278
          %v1295 = vsel %vm1263, %v1247, %v1279
          %v1296 = vsel %vm1264, %v1248, %v1280
          %v1297 = vsel %vm1265, %v1249, %v1281
          %v1298 = vsel %vm1266, %v1250, %v1282
          %v1299 = vld [vmem:[%s7] sm:$0x1]
          %v1300 = vpack.c.bf16 %v1299, %v1299
          %v1301 = vpack.c.bf16 %v1284, %v1283
          %v1302 = vpack.c.bf16 %v1286, %v1285
          %v1303 = vpack.c.bf16 %v1288, %v1287
          %v1304 = vpack.c.bf16 %v1290, %v1289
          %v1305 = vpack.c.bf16 %v1292, %v1291
          %v1306 = vpack.c.bf16 %v1294, %v1293
          %v1307 = vpack.c.bf16 %v1296, %v1295
          %v1308 = vpack.c.bf16 %v1298, %v1297
          %s1309 = sld [smem:[#allocation7]]
          %v1310 = vstv %s1309
          %1311 = vmatpush.bf16.xpose.msra.mxu0 %v1308
          %1312 = vmatpush.bf16.xpose.msra.mxu0 %v1307
          %1313 = vmatpush.bf16.xpose.msra.mxu0 %v1306
          %1314 = vmatpush.bf16.xpose.msra.mxu0 %v1305
          %1315 = vmatpush.bf16.xpose.msra.mxu0 %v1304
          %1316 = vmatpush.bf16.xpose.msra.mxu0 %v1303
          %1317 = vmatpush.bf16.xpose.msra.mxu0 %v1302
          %1318 = vmatpush.bf16.xpose.msra.mxu0 %v1301
          %1319 = vmatmul.bf16.gmra.mxu0 %v1300
          %v1320 = vpop.f32.mrf.mxu0
          %v1321 = vadd.f32 %v1310, %v1320
          %v1322 = vpop.f32.mrf.mxu0
          %1323 = vdwg.mxu0
          %v1324 = vsub.f32 0.0, %v1321
          %v1325 = vmul.f32 %v1324, 1.442695
          %v1326 = vpow.pop %v1325
          %v1327 = vadd.f32 %v1326, 1.0
          %v1328 = vrcp.pop %v1327
          %1329 = vst [vmem:[%s360] sm:$0x1] %v1328
        $region76: #{tpu_custom_call.1} parent=55 // pred_fallthru
          _
        %s1330 = sand.u32 %s242, 1
        %s1331 = scalar_lea.sflag [#allocation9], %s1330
        %s1332 = sand.u32 %s242, 1
        %s1333 = scalar_lea.vmem [#allocation8], %s1332
        // Predicated region
        $region81: #{tpu_custom_call.1} parent=55 // pred_check
          %p1334 = pneg %p252
        $region82: #{tpu_custom_call.1} parent=55 // pred_check_branch
          %1336 = sbr.rel (%p1334) target = $region84
        $region83: #{tpu_custom_call.1} parent=55 // pred_region
          %1338 = vsyncadd %s1331, 0
          %s1339 = scalar_lea.hbm %s9, %s29
          %s1341 = sshll.u32 %s1333, 4
          %s1342 = int_to_ptr.vmem [resolvable:$true] %s1341
          %s1343 = sshll.u32 %s1339, 4
          %s1344 = int_to_ptr.hbm [resolvable:$true] %s1343
          %1346 = dma.vmem_to_hbm [thread:$0]  %s1342, 16, %s1344, %s1331
        $region84: #{tpu_custom_call.1} parent=55 // pred_fallthru
          _
      $region56: #{tpu_custom_call.1} parent=5 // pred_fallthru
        _
      %p1347 = scmp.le.s32.totalorder 2, %s19
      // Predicated region
      $region85: #{tpu_custom_call.1} parent=5 // pred_check
        %p1348 = pneg %p1347
      $region86: #{tpu_custom_call.1} parent=5 // pred_check_branch
        %1350 = sbr.rel (%p1348) target = $region88
      $region87: #{tpu_custom_call.1} parent=5 // pred_region
        %s1351 = ssub.s32 %s19, 2
        // Predicated region
        $region89: #{tpu_custom_call.1} parent=87 // pred_check
          %p1352 = pneg %p258
        $region90: #{tpu_custom_call.1} parent=87 // pred_check_branch
          %1354 = sbr.rel (%p1352) target = $region92
        $region91: #{tpu_custom_call.1} parent=87 // pred_region
          %s1355 = sand.u32 %s243, 1
          %s1356 = scalar_lea.sflag [#allocation9], %s1355
          %s1357 = sand.u32 %s243, 1
          %s1358 = scalar_lea.vmem [#allocation8], %s1357
          %1360 = dma.done %s1356, 16
        $region92: #{tpu_custom_call.1} parent=87 // pred_fallthru
          _
      $region88: #{tpu_custom_call.1} parent=5 // pred_fallthru
        _
    $region6: #{tpu_custom_call.1} parent=1 // loop_footer
      %s23 = sadd.s32 1, %s19
    $region7: #{tpu_custom_call.1} parent=1 // loop_footer_branch
      %18 = sbr.rel target = $region3
    $region8: #{tpu_custom_call.1} parent=1 // loop_exit
      _
    %1361 = vsyncpa [#allocation9], 1
    %s1362 = scalar_lea.sflag [#allocation9], 1
    %1363 = vsyncpa %s1362, 1

</llo_original>
